<compile_context>
chip_gen: v5e
topology: v5e:2x2
jax: 0.10.0
libtpu: 0.0.40
codegen_flags: <defaults>
</compile_context>

<pallas_src>
import math

import jax
import jax.numpy as jnp
from jax.experimental import pallas as pl
from jax.experimental.pallas import tpu as pltpu


def lstm_linear_kernel(x_ref, wih_ref, whh_ref, b_ref, wlin_ref, blin_ref,
                       out_ref, hn_ref, cn_ref):
    """x_ref:   (T*Bp, I)   time-major, batch-padded, flattened input;
    wih_ref:    (I, 4*Hp)   gate-aligned input weights, gate order [i,f,o,g];
    whh_ref:    (Hp, 4*Hp)  gate-aligned recurrent weights;
    b_ref:      (1, 4*Hp)   fused (b_ih + b_hh), gate-aligned;
    wlin_ref:   (1, Hp)     linear head weights (zero-padded past H);
    blin_ref:   (1, 1)      linear head bias;
    out_ref:    (T*Bp, 1)   per-step linear-head output (time-major);
    hn_ref/cn_ref: (Bp, Hp) final hidden / cell state (padded)."""
    Bp, Hp = hn_ref.shape
    T = out_ref.shape[0] // Bp

    # --- hoisted input projection: one MXU matmul for all T time steps ------
    xw = (jnp.dot(x_ref[...], wih_ref[...], preferred_element_type=jnp.float32)
          + b_ref[...])                                   # (T*Bp, 4*Hp)

    whh = whh_ref[...]                                    # (Hp, 4*Hp)
    wlin = wlin_ref[...]                                  # (1, Hp)

    h = jnp.zeros((Bp, Hp), jnp.float32)
    c = jnp.zeros((Bp, Hp), jnp.float32)
    h_list = []

    # --- fully-unrolled serial recurrence (T small & static) ----------------
    # Gate layout: [i, f, o, g] -> one fused sigmoid over the first 3 blocks.
    for t in range(T):
        gates = xw[t * Bp:(t + 1) * Bp, :] + jnp.dot(
            h, whh, preferred_element_type=jnp.float32)   # (Bp, 4*Hp)
        # sigmoid(x) == 0.5*tanh(0.5*x) + 0.5  (single EUP push for i/f/o)
        ifo = 0.5 * jnp.tanh(0.5 * gates[:, :3 * Hp]) + 0.5
        i_g = ifo[:, 0 * Hp:1 * Hp]
        f_g = ifo[:, 1 * Hp:2 * Hp]
        o_g = ifo[:, 2 * Hp:3 * Hp]
        g_g = jnp.tanh(gates[:, 3 * Hp:4 * Hp])
        c = f_g * c + i_g * g_g
        h = o_g * jnp.tanh(c)
        h_list.append(h)

    # --- linear head, hoisted out of the recurrence: one batched VPU multiply
    #     + lane reduce over all time steps, single dense store. ---------------
    hs = jnp.concatenate(h_list, axis=0)                  # (T*Bp, Hp)
    out_ref[...] = (jnp.sum(hs * wlin, axis=-1, keepdims=True)
                    + blin_ref[...])                      # (T*Bp, 1)

    hn_ref[...] = h
    cn_ref[...] = c


def lstm_pt_forward(x, params):
    """x: (B, T, input_size) float32.  Returns (output, cell_state, hidden_state)
    matching the PyTorch module: output (B, T, 1), cell_state==h_n (1, B, H),
    hidden_state==c_n (1, B, H)."""
    B, T, I = x.shape
    H = params["W_hh"].shape[1]
    Hp = ((H + 127) // 128) * 128            # each gate gets its own lane block
    Bp = ((B + 7) // 8) * 8                  # full 8-sublane batch tile

    # Time-major, batch-padded, flattened: row t*Bp + b holds x[b, t, :].
    x_tm = jnp.transpose(x, (1, 0, 2)).astype(jnp.float32)       # (T, B, I)
    x_pad = jnp.zeros((T, Bp, I), jnp.float32).at[:, :B, :].set(x_tm)
    x_flat = x_pad.reshape(T * Bp, I)

    # Kernel gate order [i, f, o, g] <- PyTorch gate order [i, f, g, o].
    gate_src = (0, 1, 3, 2)

    def pack_gate_cols(w):
        """(4H, In) PyTorch weight -> (In, 4*Hp), gate k in lanes [k*Hp, k*Hp+H)."""
        n_in = w.shape[1]
        out = jnp.zeros((n_in, 4 * Hp), jnp.float32)
        for k, src in enumerate(gate_src):
            out = out.at[:, k * Hp:k * Hp + H].set(w[src * H:(src + 1) * H, :].T)
        return out

    wih_p = pack_gate_cols(params["W_ih"])                       # (I, 4*Hp)
    whh_p = jnp.zeros((Hp, 4 * Hp), jnp.float32)
    whh_p = whh_p.at[:H, :].set(pack_gate_cols(params["W_hh"]))  # (Hp, 4*Hp)

    b4 = (params["b_ih"] + params["b_hh"]).astype(jnp.float32)
    b_p = jnp.zeros((1, 4 * Hp), jnp.float32)
    for k, src in enumerate(gate_src):
        b_p = b_p.at[0, k * Hp:k * Hp + H].set(b4[src * H:(src + 1) * H])

    wlin_p = jnp.zeros((1, Hp), jnp.float32).at[0, :H].set(params["W_lin"][0])
    blin = params["b_lin"].reshape(1, 1).astype(jnp.float32)

    vmem = pl.BlockSpec(memory_space=pltpu.MemorySpace.VMEM)
    out_shapes = (
        jax.ShapeDtypeStruct((T * Bp, 1), jnp.float32),   # head output, time-major
        jax.ShapeDtypeStruct((Bp, Hp), jnp.float32),      # h_n (padded)
        jax.ShapeDtypeStruct((Bp, Hp), jnp.float32),      # c_n (padded)
    )

    out_col, hn_p, cn_p = pl.pallas_call(
        lstm_linear_kernel,
        out_shape=out_shapes,
        in_specs=[vmem] * 6,
        out_specs=(vmem, vmem, vmem),
    )(x_flat, wih_p, whh_p, b_p, wlin_p, blin)

    # Layout plumbing back to PyTorch shapes (free, outside the kernel).
    output = jnp.transpose(out_col.reshape(T, Bp, 1), (1, 0, 2))[:B]  # (B, T, 1)
    h_n = hn_p[:B, :H][None]              # (1, B, H)
    c_n = cn_p[:B, :H][None]              # (1, B, H)
    # Reproduce the module's (mis)labelled return ordering: (output, h_n, c_n).
    return output, h_n, c_n


def lstm_pt_reference(x, params):
    """Pure-JAX reference mirroring torch.nn.LSTM + Linear semantics."""
    B, T, _ = x.shape
    H = params["W_hh"].shape[1]
    h = jnp.zeros((B, H), jnp.float32)
    c = jnp.zeros((B, H), jnp.float32)
    outs = []
    for t in range(T):
        g = (x[:, t] @ params["W_ih"].T + h @ params["W_hh"].T
             + params["b_ih"] + params["b_hh"])
        i_g = jax.nn.sigmoid(g[:, :H])
        f_g = jax.nn.sigmoid(g[:, H:2 * H])
        g_g = jnp.tanh(g[:, 2 * H:3 * H])
        o_g = jax.nn.sigmoid(g[:, 3 * H:])
        c = f_g * c + i_g * g_g
        h = o_g * jnp.tanh(c)
        outs.append(h @ params["W_lin"].T + params["b_lin"])
    return jnp.stack(outs, axis=1), h[None], c[None]


if __name__ == "__main__":
    hidden_size = 20
    input_size = 15
    output_size = 1
    B, T = 2, 8

    key = jax.random.PRNGKey(0)
    kx, k1, k2, k3, k4, k5, k6 = jax.random.split(key, 7)

    # Deterministic init matching PyTorch's U(-1/sqrt(H), 1/sqrt(H)) scheme.
    ks = 1.0 / math.sqrt(hidden_size)
    params = {
        "W_ih": jax.random.uniform(k1, (4 * hidden_size, input_size),
                                   jnp.float32, -ks, ks),
        "W_hh": jax.random.uniform(k2, (4 * hidden_size, hidden_size),
                                   jnp.float32, -ks, ks),
        "b_ih": jax.random.uniform(k3, (4 * hidden_size,), jnp.float32, -ks, ks),
        "b_hh": jax.random.uniform(k4, (4 * hidden_size,), jnp.float32, -ks, ks),
        "W_lin": jax.random.uniform(k5, (output_size, hidden_size),
                                    jnp.float32, -ks, ks),
        "b_lin": jax.random.uniform(k6, (output_size,), jnp.float32, -ks, ks),
    }

    x = jax.random.normal(kx, (B, T, input_size), jnp.float32)

    out, cell_state, hidden_state = jax.block_until_ready(
        lstm_pt_forward(x, params))

    ref_out, ref_h, ref_c = lstm_pt_reference(x, params)
    assert out.shape == (B, T, output_size)
    assert cell_state.shape == (1, B, hidden_size)
    assert hidden_state.shape == (1, B, hidden_size)
    assert jnp.allclose(out, ref_out, atol=1e-4)
    assert jnp.allclose(cell_state, ref_h, atol=1e-4)
    assert jnp.allclose(hidden_state, ref_c, atol=1e-4)

    # TODO(synk): v5e weight-stationary recurrence via pltpu.matmul_push_rhs /
    # matmul_acc_lhs / matmul_pop (hold whh in MXU staging regs across all T
    # steps) left out; jnp.dot keeps the kernel portable across generations.
    print("KERNEL_OK")
</pallas_src>

<mosaic_0001>
module attributes {stable_mosaic.version = 11 : i64} {
  func.func @lstm_linear_kernel(%arg0: memref<64x15xf32, #tpu.memory_space<vmem>>, %arg1: memref<15x512xf32, #tpu.memory_space<vmem>>, %arg2: memref<128x512xf32, #tpu.memory_space<vmem>>, %arg3: memref<1x512xf32, #tpu.memory_space<vmem>>, %arg4: memref<1x128xf32, #tpu.memory_space<vmem>>, %arg5: memref<1x1xf32, #tpu.memory_space<vmem>>, %arg6: memref<64x1xf32, #tpu.memory_space<vmem>>, %arg7: memref<8x128xf32, #tpu.memory_space<vmem>>, %arg8: memref<8x128xf32, #tpu.memory_space<vmem>>) attributes {dimension_semantics = [], scalar_prefetch = 0 : i64, scratch_operands = 0 : i64, tpu.core_type = #tpu.core_type<tc>} {
    %c0 = arith.constant 0 : index
    %c0_0 = arith.constant 0 : index
    %0 = vector.load %arg0[%c0, %c0_0] : memref<64x15xf32, #tpu.memory_space<vmem>>, vector<64x15xf32>
    %c0_1 = arith.constant 0 : index
    %c0_2 = arith.constant 0 : index
    %1 = vector.load %arg1[%c0_1, %c0_2] : memref<15x512xf32, #tpu.memory_space<vmem>>, vector<15x512xf32>
    %cst = arith.constant dense<0.000000e+00> : vector<64x512xf32>
    %2 = tpu.matmul %0, %1, %cst {dimension_numbers = #tpu.dot_dimension_numbers<[1], [0], [0], [1], [0, 0, 1, 1], [], []>} : vector<64x15xf32>, vector<15x512xf32>, vector<64x512xf32> -> vector<64x512xf32>
    %c0_3 = arith.constant 0 : index
    %c0_4 = arith.constant 0 : index
    %3 = vector.load %arg3[%c0_3, %c0_4] : memref<1x512xf32, #tpu.memory_space<vmem>>, vector<1x512xf32>
    %4 = vector.broadcast %3 : vector<1x512xf32> to vector<64x512xf32>
    %5 = arith.addf %2, %4 : vector<64x512xf32>
    %c0_5 = arith.constant 0 : index
    %c0_6 = arith.constant 0 : index
    %6 = vector.load %arg2[%c0_5, %c0_6] : memref<128x512xf32, #tpu.memory_space<vmem>>, vector<128x512xf32>
    %c0_7 = arith.constant 0 : index
    %c0_8 = arith.constant 0 : index
    %7 = vector.load %arg4[%c0_7, %c0_8] : memref<1x128xf32, #tpu.memory_space<vmem>>, vector<1x128xf32>
    %cst_9 = arith.constant 0.000000e+00 : f32
    %8 = vector.broadcast %cst_9 : f32 to vector<8x128xf32>
    %cst_10 = arith.constant 0.000000e+00 : f32
    %9 = vector.broadcast %cst_10 : f32 to vector<8x128xf32>
    %10 = vector.extract_strided_slice %5 {offsets = [0, 0], sizes = [8, 512], strides = [1, 1]} : vector<64x512xf32> to vector<8x512xf32>
    %cst_11 = arith.constant dense<0.000000e+00> : vector<8x512xf32>
    %11 = tpu.matmul %8, %6, %cst_11 {dimension_numbers = #tpu.dot_dimension_numbers<[1], [0], [0], [1], [0, 0, 1, 1], [], []>} : vector<8x128xf32>, vector<128x512xf32>, vector<8x512xf32> -> vector<8x512xf32>
    %12 = arith.addf %10, %11 : vector<8x512xf32>
    %13 = vector.extract_strided_slice %12 {offsets = [0, 0], sizes = [8, 384], strides = [1, 1]} : vector<8x512xf32> to vector<8x384xf32>
    %cst_12 = arith.constant 5.000000e-01 : f32
    %14 = vector.broadcast %cst_12 : f32 to vector<8x384xf32>
    %15 = arith.mulf %14, %13 : vector<8x384xf32>
    %16 = math.tanh %15 : vector<8x384xf32>
    %cst_13 = arith.constant 5.000000e-01 : f32
    %17 = vector.broadcast %cst_13 : f32 to vector<8x384xf32>
    %18 = arith.mulf %17, %16 : vector<8x384xf32>
    %cst_14 = arith.constant 5.000000e-01 : f32
    %19 = vector.broadcast %cst_14 : f32 to vector<8x384xf32>
    %20 = arith.addf %18, %19 : vector<8x384xf32>
    %21 = vector.extract_strided_slice %20 {offsets = [0, 0], sizes = [8, 128], strides = [1, 1]} : vector<8x384xf32> to vector<8x128xf32>
    %22 = vector.extract_strided_slice %20 {offsets = [0, 128], sizes = [8, 128], strides = [1, 1]} : vector<8x384xf32> to vector<8x128xf32>
    %23 = vector.extract_strided_slice %20 {offsets = [0, 256], sizes = [8, 128], strides = [1, 1]} : vector<8x384xf32> to vector<8x128xf32>
    %24 = vector.extract_strided_slice %12 {offsets = [0, 384], sizes = [8, 128], strides = [1, 1]} : vector<8x512xf32> to vector<8x128xf32>
    %25 = math.tanh %24 : vector<8x128xf32>
    %26 = arith.mulf %22, %9 : vector<8x128xf32>
    %27 = arith.mulf %21, %25 : vector<8x128xf32>
    %28 = arith.addf %26, %27 : vector<8x128xf32>
    %29 = math.tanh %28 : vector<8x128xf32>
    %30 = arith.mulf %23, %29 : vector<8x128xf32>
    %31 = vector.extract_strided_slice %5 {offsets = [8, 0], sizes = [8, 512], strides = [1, 1]} : vector<64x512xf32> to vector<8x512xf32>
    %cst_15 = arith.constant dense<0.000000e+00> : vector<8x512xf32>
    %32 = tpu.matmul %30, %6, %cst_15 {dimension_numbers = #tpu.dot_dimension_numbers<[1], [0], [0], [1], [0, 0, 1, 1], [], []>} : vector<8x128xf32>, vector<128x512xf32>, vector<8x512xf32> -> vector<8x512xf32>
    %33 = arith.addf %31, %32 : vector<8x512xf32>
    %34 = vector.extract_strided_slice %33 {offsets = [0, 0], sizes = [8, 384], strides = [1, 1]} : vector<8x512xf32> to vector<8x384xf32>
    %cst_16 = arith.constant 5.000000e-01 : f32
    %35 = vector.broadcast %cst_16 : f32 to vector<8x384xf32>
    %36 = arith.mulf %35, %34 : vector<8x384xf32>
    %37 = math.tanh %36 : vector<8x384xf32>
    %cst_17 = arith.constant 5.000000e-01 : f32
    %38 = vector.broadcast %cst_17 : f32 to vector<8x384xf32>
    %39 = arith.mulf %38, %37 : vector<8x384xf32>
    %cst_18 = arith.constant 5.000000e-01 : f32
    %40 = vector.broadcast %cst_18 : f32 to vector<8x384xf32>
    %41 = arith.addf %39, %40 : vector<8x384xf32>
    %42 = vector.extract_strided_slice %41 {offsets = [0, 0], sizes = [8, 128], strides = [1, 1]} : vector<8x384xf32> to vector<8x128xf32>
    %43 = vector.extract_strided_slice %41 {offsets = [0, 128], sizes = [8, 128], strides = [1, 1]} : vector<8x384xf32> to vector<8x128xf32>
    %44 = vector.extract_strided_slice %41 {offsets = [0, 256], sizes = [8, 128], strides = [1, 1]} : vector<8x384xf32> to vector<8x128xf32>
    %45 = vector.extract_strided_slice %33 {offsets = [0, 384], sizes = [8, 128], strides = [1, 1]} : vector<8x512xf32> to vector<8x128xf32>
    %46 = math.tanh %45 : vector<8x128xf32>
    %47 = arith.mulf %43, %28 : vector<8x128xf32>
    %48 = arith.mulf %42, %46 : vector<8x128xf32>
    %49 = arith.addf %47, %48 : vector<8x128xf32>
    %50 = math.tanh %49 : vector<8x128xf32>
    %51 = arith.mulf %44, %50 : vector<8x128xf32>
    %52 = vector.extract_strided_slice %5 {offsets = [16, 0], sizes = [8, 512], strides = [1, 1]} : vector<64x512xf32> to vector<8x512xf32>
    %cst_19 = arith.constant dense<0.000000e+00> : vector<8x512xf32>
    %53 = tpu.matmul %51, %6, %cst_19 {dimension_numbers = #tpu.dot_dimension_numbers<[1], [0], [0], [1], [0, 0, 1, 1], [], []>} : vector<8x128xf32>, vector<128x512xf32>, vector<8x512xf32> -> vector<8x512xf32>
    %54 = arith.addf %52, %53 : vector<8x512xf32>
    %55 = vector.extract_strided_slice %54 {offsets = [0, 0], sizes = [8, 384], strides = [1, 1]} : vector<8x512xf32> to vector<8x384xf32>
    %cst_20 = arith.constant 5.000000e-01 : f32
    %56 = vector.broadcast %cst_20 : f32 to vector<8x384xf32>
    %57 = arith.mulf %56, %55 : vector<8x384xf32>
    %58 = math.tanh %57 : vector<8x384xf32>
    %cst_21 = arith.constant 5.000000e-01 : f32
    %59 = vector.broadcast %cst_21 : f32 to vector<8x384xf32>
    %60 = arith.mulf %59, %58 : vector<8x384xf32>
    %cst_22 = arith.constant 5.000000e-01 : f32
    %61 = vector.broadcast %cst_22 : f32 to vector<8x384xf32>
    %62 = arith.addf %60, %61 : vector<8x384xf32>
    %63 = vector.extract_strided_slice %62 {offsets = [0, 0], sizes = [8, 128], strides = [1, 1]} : vector<8x384xf32> to vector<8x128xf32>
    %64 = vector.extract_strided_slice %62 {offsets = [0, 128], sizes = [8, 128], strides = [1, 1]} : vector<8x384xf32> to vector<8x128xf32>
    %65 = vector.extract_strided_slice %62 {offsets = [0, 256], sizes = [8, 128], strides = [1, 1]} : vector<8x384xf32> to vector<8x128xf32>
    %66 = vector.extract_strided_slice %54 {offsets = [0, 384], sizes = [8, 128], strides = [1, 1]} : vector<8x512xf32> to vector<8x128xf32>
    %67 = math.tanh %66 : vector<8x128xf32>
    %68 = arith.mulf %64, %49 : vector<8x128xf32>
    %69 = arith.mulf %63, %67 : vector<8x128xf32>
    %70 = arith.addf %68, %69 : vector<8x128xf32>
    %71 = math.tanh %70 : vector<8x128xf32>
    %72 = arith.mulf %65, %71 : vector<8x128xf32>
    %73 = vector.extract_strided_slice %5 {offsets = [24, 0], sizes = [8, 512], strides = [1, 1]} : vector<64x512xf32> to vector<8x512xf32>
    %cst_23 = arith.constant dense<0.000000e+00> : vector<8x512xf32>
    %74 = tpu.matmul %72, %6, %cst_23 {dimension_numbers = #tpu.dot_dimension_numbers<[1], [0], [0], [1], [0, 0, 1, 1], [], []>} : vector<8x128xf32>, vector<128x512xf32>, vector<8x512xf32> -> vector<8x512xf32>
    %75 = arith.addf %73, %74 : vector<8x512xf32>
    %76 = vector.extract_strided_slice %75 {offsets = [0, 0], sizes = [8, 384], strides = [1, 1]} : vector<8x512xf32> to vector<8x384xf32>
    %cst_24 = arith.constant 5.000000e-01 : f32
    %77 = vector.broadcast %cst_24 : f32 to vector<8x384xf32>
    %78 = arith.mulf %77, %76 : vector<8x384xf32>
    %79 = math.tanh %78 : vector<8x384xf32>
    %cst_25 = arith.constant 5.000000e-01 : f32
    %80 = vector.broadcast %cst_25 : f32 to vector<8x384xf32>
    %81 = arith.mulf %80, %79 : vector<8x384xf32>
    %cst_26 = arith.constant 5.000000e-01 : f32
    %82 = vector.broadcast %cst_26 : f32 to vector<8x384xf32>
    %83 = arith.addf %81, %82 : vector<8x384xf32>
    %84 = vector.extract_strided_slice %83 {offsets = [0, 0], sizes = [8, 128], strides = [1, 1]} : vector<8x384xf32> to vector<8x128xf32>
    %85 = vector.extract_strided_slice %83 {offsets = [0, 128], sizes = [8, 128], strides = [1, 1]} : vector<8x384xf32> to vector<8x128xf32>
    %86 = vector.extract_strided_slice %83 {offsets = [0, 256], sizes = [8, 128], strides = [1, 1]} : vector<8x384xf32> to vector<8x128xf32>
    %87 = vector.extract_strided_slice %75 {offsets = [0, 384], sizes = [8, 128], strides = [1, 1]} : vector<8x512xf32> to vector<8x128xf32>
    %88 = math.tanh %87 : vector<8x128xf32>
    %89 = arith.mulf %85, %70 : vector<8x128xf32>
    %90 = arith.mulf %84, %88 : vector<8x128xf32>
    %91 = arith.addf %89, %90 : vector<8x128xf32>
    %92 = math.tanh %91 : vector<8x128xf32>
    %93 = arith.mulf %86, %92 : vector<8x128xf32>
    %94 = vector.extract_strided_slice %5 {offsets = [32, 0], sizes = [8, 512], strides = [1, 1]} : vector<64x512xf32> to vector<8x512xf32>
    %cst_27 = arith.constant dense<0.000000e+00> : vector<8x512xf32>
    %95 = tpu.matmul %93, %6, %cst_27 {dimension_numbers = #tpu.dot_dimension_numbers<[1], [0], [0], [1], [0, 0, 1, 1], [], []>} : vector<8x128xf32>, vector<128x512xf32>, vector<8x512xf32> -> vector<8x512xf32>
    %96 = arith.addf %94, %95 : vector<8x512xf32>
    %97 = vector.extract_strided_slice %96 {offsets = [0, 0], sizes = [8, 384], strides = [1, 1]} : vector<8x512xf32> to vector<8x384xf32>
    %cst_28 = arith.constant 5.000000e-01 : f32
    %98 = vector.broadcast %cst_28 : f32 to vector<8x384xf32>
    %99 = arith.mulf %98, %97 : vector<8x384xf32>
    %100 = math.tanh %99 : vector<8x384xf32>
    %cst_29 = arith.constant 5.000000e-01 : f32
    %101 = vector.broadcast %cst_29 : f32 to vector<8x384xf32>
    %102 = arith.mulf %101, %100 : vector<8x384xf32>
    %cst_30 = arith.constant 5.000000e-01 : f32
    %103 = vector.broadcast %cst_30 : f32 to vector<8x384xf32>
    %104 = arith.addf %102, %103 : vector<8x384xf32>
    %105 = vector.extract_strided_slice %104 {offsets = [0, 0], sizes = [8, 128], strides = [1, 1]} : vector<8x384xf32> to vector<8x128xf32>
    %106 = vector.extract_strided_slice %104 {offsets = [0, 128], sizes = [8, 128], strides = [1, 1]} : vector<8x384xf32> to vector<8x128xf32>
    %107 = vector.extract_strided_slice %104 {offsets = [0, 256], sizes = [8, 128], strides = [1, 1]} : vector<8x384xf32> to vector<8x128xf32>
    %108 = vector.extract_strided_slice %96 {offsets = [0, 384], sizes = [8, 128], strides = [1, 1]} : vector<8x512xf32> to vector<8x128xf32>
    %109 = math.tanh %108 : vector<8x128xf32>
    %110 = arith.mulf %106, %91 : vector<8x128xf32>
    %111 = arith.mulf %105, %109 : vector<8x128xf32>
    %112 = arith.addf %110, %111 : vector<8x128xf32>
    %113 = math.tanh %112 : vector<8x128xf32>
    %114 = arith.mulf %107, %113 : vector<8x128xf32>
    %115 = vector.extract_strided_slice %5 {offsets = [40, 0], sizes = [8, 512], strides = [1, 1]} : vector<64x512xf32> to vector<8x512xf32>
    %cst_31 = arith.constant dense<0.000000e+00> : vector<8x512xf32>
    %116 = tpu.matmul %114, %6, %cst_31 {dimension_numbers = #tpu.dot_dimension_numbers<[1], [0], [0], [1], [0, 0, 1, 1], [], []>} : vector<8x128xf32>, vector<128x512xf32>, vector<8x512xf32> -> vector<8x512xf32>
    %117 = arith.addf %115, %116 : vector<8x512xf32>
    %118 = vector.extract_strided_slice %117 {offsets = [0, 0], sizes = [8, 384], strides = [1, 1]} : vector<8x512xf32> to vector<8x384xf32>
    %cst_32 = arith.constant 5.000000e-01 : f32
    %119 = vector.broadcast %cst_32 : f32 to vector<8x384xf32>
    %120 = arith.mulf %119, %118 : vector<8x384xf32>
    %121 = math.tanh %120 : vector<8x384xf32>
    %cst_33 = arith.constant 5.000000e-01 : f32
    %122 = vector.broadcast %cst_33 : f32 to vector<8x384xf32>
    %123 = arith.mulf %122, %121 : vector<8x384xf32>
    %cst_34 = arith.constant 5.000000e-01 : f32
    %124 = vector.broadcast %cst_34 : f32 to vector<8x384xf32>
    %125 = arith.addf %123, %124 : vector<8x384xf32>
    %126 = vector.extract_strided_slice %125 {offsets = [0, 0], sizes = [8, 128], strides = [1, 1]} : vector<8x384xf32> to vector<8x128xf32>
    %127 = vector.extract_strided_slice %125 {offsets = [0, 128], sizes = [8, 128], strides = [1, 1]} : vector<8x384xf32> to vector<8x128xf32>
    %128 = vector.extract_strided_slice %125 {offsets = [0, 256], sizes = [8, 128], strides = [1, 1]} : vector<8x384xf32> to vector<8x128xf32>
    %129 = vector.extract_strided_slice %117 {offsets = [0, 384], sizes = [8, 128], strides = [1, 1]} : vector<8x512xf32> to vector<8x128xf32>
    %130 = math.tanh %129 : vector<8x128xf32>
    %131 = arith.mulf %127, %112 : vector<8x128xf32>
    %132 = arith.mulf %126, %130 : vector<8x128xf32>
    %133 = arith.addf %131, %132 : vector<8x128xf32>
    %134 = math.tanh %133 : vector<8x128xf32>
    %135 = arith.mulf %128, %134 : vector<8x128xf32>
    %136 = vector.extract_strided_slice %5 {offsets = [48, 0], sizes = [8, 512], strides = [1, 1]} : vector<64x512xf32> to vector<8x512xf32>
    %cst_35 = arith.constant dense<0.000000e+00> : vector<8x512xf32>
    %137 = tpu.matmul %135, %6, %cst_35 {dimension_numbers = #tpu.dot_dimension_numbers<[1], [0], [0], [1], [0, 0, 1, 1], [], []>} : vector<8x128xf32>, vector<128x512xf32>, vector<8x512xf32> -> vector<8x512xf32>
    %138 = arith.addf %136, %137 : vector<8x512xf32>
    %139 = vector.extract_strided_slice %138 {offsets = [0, 0], sizes = [8, 384], strides = [1, 1]} : vector<8x512xf32> to vector<8x384xf32>
    %cst_36 = arith.constant 5.000000e-01 : f32
    %140 = vector.broadcast %cst_36 : f32 to vector<8x384xf32>
    %141 = arith.mulf %140, %139 : vector<8x384xf32>
    %142 = math.tanh %141 : vector<8x384xf32>
    %cst_37 = arith.constant 5.000000e-01 : f32
    %143 = vector.broadcast %cst_37 : f32 to vector<8x384xf32>
    %144 = arith.mulf %143, %142 : vector<8x384xf32>
    %cst_38 = arith.constant 5.000000e-01 : f32
    %145 = vector.broadcast %cst_38 : f32 to vector<8x384xf32>
    %146 = arith.addf %144, %145 : vector<8x384xf32>
    %147 = vector.extract_strided_slice %146 {offsets = [0, 0], sizes = [8, 128], strides = [1, 1]} : vector<8x384xf32> to vector<8x128xf32>
    %148 = vector.extract_strided_slice %146 {offsets = [0, 128], sizes = [8, 128], strides = [1, 1]} : vector<8x384xf32> to vector<8x128xf32>
    %149 = vector.extract_strided_slice %146 {offsets = [0, 256], sizes = [8, 128], strides = [1, 1]} : vector<8x384xf32> to vector<8x128xf32>
    %150 = vector.extract_strided_slice %138 {offsets = [0, 384], sizes = [8, 128], strides = [1, 1]} : vector<8x512xf32> to vector<8x128xf32>
    %151 = math.tanh %150 : vector<8x128xf32>
    %152 = arith.mulf %148, %133 : vector<8x128xf32>
    %153 = arith.mulf %147, %151 : vector<8x128xf32>
    %154 = arith.addf %152, %153 : vector<8x128xf32>
    %155 = math.tanh %154 : vector<8x128xf32>
    %156 = arith.mulf %149, %155 : vector<8x128xf32>
    %157 = vector.extract_strided_slice %5 {offsets = [56, 0], sizes = [8, 512], strides = [1, 1]} : vector<64x512xf32> to vector<8x512xf32>
    %cst_39 = arith.constant dense<0.000000e+00> : vector<8x512xf32>
    %158 = tpu.matmul %156, %6, %cst_39 {dimension_numbers = #tpu.dot_dimension_numbers<[1], [0], [0], [1], [0, 0, 1, 1], [], []>} : vector<8x128xf32>, vector<128x512xf32>, vector<8x512xf32> -> vector<8x512xf32>
    %159 = arith.addf %157, %158 : vector<8x512xf32>
    %160 = vector.extract_strided_slice %159 {offsets = [0, 0], sizes = [8, 384], strides = [1, 1]} : vector<8x512xf32> to vector<8x384xf32>
    %cst_40 = arith.constant 5.000000e-01 : f32
    %161 = vector.broadcast %cst_40 : f32 to vector<8x384xf32>
    %162 = arith.mulf %161, %160 : vector<8x384xf32>
    %163 = math.tanh %162 : vector<8x384xf32>
    %cst_41 = arith.constant 5.000000e-01 : f32
    %164 = vector.broadcast %cst_41 : f32 to vector<8x384xf32>
    %165 = arith.mulf %164, %163 : vector<8x384xf32>
    %cst_42 = arith.constant 5.000000e-01 : f32
    %166 = vector.broadcast %cst_42 : f32 to vector<8x384xf32>
    %167 = arith.addf %165, %166 : vector<8x384xf32>
    %168 = vector.extract_strided_slice %167 {offsets = [0, 0], sizes = [8, 128], strides = [1, 1]} : vector<8x384xf32> to vector<8x128xf32>
    %169 = vector.extract_strided_slice %167 {offsets = [0, 128], sizes = [8, 128], strides = [1, 1]} : vector<8x384xf32> to vector<8x128xf32>
    %170 = vector.extract_strided_slice %167 {offsets = [0, 256], sizes = [8, 128], strides = [1, 1]} : vector<8x384xf32> to vector<8x128xf32>
    %171 = vector.extract_strided_slice %159 {offsets = [0, 384], sizes = [8, 128], strides = [1, 1]} : vector<8x512xf32> to vector<8x128xf32>
    %172 = math.tanh %171 : vector<8x128xf32>
    %173 = arith.mulf %169, %154 : vector<8x128xf32>
    %174 = arith.mulf %168, %172 : vector<8x128xf32>
    %175 = arith.addf %173, %174 : vector<8x128xf32>
    %176 = math.tanh %175 : vector<8x128xf32>
    %177 = arith.mulf %170, %176 : vector<8x128xf32>
    %178 = tpu.concatenate %30, %51, %72, %93, %114, %135, %156, %177 in 0 : vector<8x128xf32>, vector<8x128xf32>, vector<8x128xf32>, vector<8x128xf32>, vector<8x128xf32>, vector<8x128xf32>, vector<8x128xf32>, vector<8x128xf32> -> vector<64x128xf32>
    %179 = vector.broadcast %7 : vector<1x128xf32> to vector<64x128xf32>
    %180 = arith.mulf %178, %179 : vector<64x128xf32>
    %cst_43 = arith.constant dense<0.000000e+00> : vector<64xf32>
    %181 = vector.multi_reduction <add>, %180, %cst_43 [1] : vector<64x128xf32> to vector<64xf32>
    %182 = vector.shape_cast %181 : vector<64xf32> to vector<64x1xf32>
    %c0_44 = arith.constant 0 : index
    %c0_45 = arith.constant 0 : index
    %183 = vector.load %arg5[%c0_44, %c0_45] : memref<1x1xf32, #tpu.memory_space<vmem>>, vector<1x1xf32>
    %184 = vector.broadcast %183 : vector<1x1xf32> to vector<64x1xf32>
    %185 = arith.addf %182, %184 : vector<64x1xf32>
    %c0_46 = arith.constant 0 : index
    %c0_47 = arith.constant 0 : index
    %186 = vector.load %arg6[%c0_46, %c0_47] : memref<64x1xf32, #tpu.memory_space<vmem>>, vector<64x1xf32>
    tpu.vector_store %arg6[%c0_46, %c0_47], %185 {strides = array<i32>} : memref<64x1xf32, #tpu.memory_space<vmem>>, vector<64x1xf32>,
    %c0_48 = arith.constant 0 : index
    %c0_49 = arith.constant 0 : index
    %187 = vector.load %arg7[%c0_48, %c0_49] : memref<8x128xf32, #tpu.memory_space<vmem>>, vector<8x128xf32>
    tpu.vector_store %arg7[%c0_48, %c0_49], %177 {strides = array<i32>} : memref<8x128xf32, #tpu.memory_space<vmem>>, vector<8x128xf32>,
    %c0_50 = arith.constant 0 : index
    %c0_51 = arith.constant 0 : index
    %188 = vector.load %arg8[%c0_50, %c0_51] : memref<8x128xf32, #tpu.memory_space<vmem>>, vector<8x128xf32>
    tpu.vector_store %arg8[%c0_50, %c0_51], %175 {strides = array<i32>} : memref<8x128xf32, #tpu.memory_space<vmem>>, vector<8x128xf32>,
    return
  }
}

</mosaic_0001>

<llo_original>
// kernel: tpu_custom_call.1
$region0: #{tpu_custom_call.1}
  #allocation0 [shape = 'u32[]', space=smem, size = 0x4, offset = 0x4, fixed_abs, tag = 'smem constant byte address 0x4 - core index']
  #allocation1 [shape = 'u32[72,128]{1,0:T(1,128)}', space=vmem, size = 0x9000, scoped, tag = 'internal scratch']
  #allocation2 [shape = 'f32[1,1]{1,0:T(1,128)S(1)}', space=vmem, size = 0x200, scoped, tag = 'scoped memory for tpu_custom_call.1']
  %s0 = inlined_call_operand.vmem [shape: f32[64,15], index: 0, kind: input, shape index: {}]
  %s1 = inlined_call_operand.vmem [shape: f32[15,512], index: 1, kind: input, shape index: {}]
  %s2 = inlined_call_operand.hbm [shape: f32[128,512], index: 2, kind: input, shape index: {}]
  %s3 = inlined_call_operand.vmem [shape: f32[1,512], index: 3, kind: input, shape index: {}]
  %s4 = inlined_call_operand.vmem [shape: f32[1,128], index: 4, kind: input, shape index: {}]
  %s5 = inlined_call_operand.<no memory space> [shape: f32[1,1], index: 5, kind: input, shape index: {}]
  %s6 = inlined_call_operand.vmem [shape: f32[64,1], index: 6, kind: output, shape index: {0}]
  %s7 = inlined_call_operand.hbm [shape: f32[8,128], index: 7, kind: output, shape index: {1}]
  %s8 = inlined_call_operand.hbm [shape: f32[8,128], index: 8, kind: output, shape index: {2}]
  %9 = xla_tuple %s6, %s7, %s8
  %s10 = sld [smem:[#allocation0]]
  $region54: #{tpu_custom_call.1} parent=0
    _
  %s12 = ssub.s32 1, %s10
  %s13 = scalar_select 0, %s12, %s10
  %v14 = vstv %s5
  %15 = vst [vmem:[#allocation2] sm:$0x1] %v14
  $region1: #{tpu_custom_call.1} parent=0
    #allocation3 [shape = 'u8[262144]{0}', space=vmem, size = 0x40000, scoped, tag = 'input window, operand 2, single buffered']
    #allocation4 [shape = 's32[1]{0}', space=sflag, size = 0x4, scoped, tag = 'scoped memory for tpu_custom_call.1']
    #allocation5 [shape = 's32[1]{0}', space=sflag, size = 0x4, scoped, tag = 'scoped memory for tpu_custom_call.1']
    #allocation6 [shape = 'u8[4096]{0}', space=vmem, size = 0x1000, scoped, tag = 'output window, operand 1, single buffered']
    #allocation7 [shape = 'u8[4096]{0}', space=vmem, size = 0x1000, scoped, tag = 'output window, operand 2, single buffered']
    #allocation8 [shape = 's32[1]{0}', space=sflag, size = 0x4, scoped, tag = 'scoped memory for tpu_custom_call.1']
    %16 = vsyncpa [#allocation4], 0
    %17 = vsyncpa [#allocation5], 0
    %18 = vsyncpa [#allocation8], 0
    // Predicated region
    $region2: #{tpu_custom_call.1} parent=1 // pred_check
      _
    $region3: #{tpu_custom_call.1} parent=1 // pred_check_branch
      %20 = sbr.rel (0) target = $region5
    $region4: #{tpu_custom_call.1} parent=1 // pred_region
      _
    $region5: #{tpu_custom_call.1} parent=1 // pred_fallthru
      _
    // Predicated region
    $region6: #{tpu_custom_call.1} parent=1 // pred_check
      _
    $region7: #{tpu_custom_call.1} parent=1 // pred_check_branch
      %22 = sbr.rel (0) target = $region9
    $region8: #{tpu_custom_call.1} parent=1 // pred_region
      _
    $region9: #{tpu_custom_call.1} parent=1 // pred_fallthru
      _
    // Predicated region
    $region10: #{tpu_custom_call.1} parent=1 // pred_check
      _
    $region11: #{tpu_custom_call.1} parent=1 // pred_check_branch
      %24 = sbr.rel (0) target = $region13
    $region12: #{tpu_custom_call.1} parent=1 // pred_region
      %26 = vsyncadd [#allocation4], 0
      %s27 = sshll.u32 %s2, 4
      %s28 = int_to_ptr.hbm [resolvable:$true] %s27
      %s29 = sshll.u32 [#allocation3], 4
      %s30 = int_to_ptr.vmem [resolvable:$true] %s29
      %35 = dma.hbm_to_vmem [thread:$0]  %s28, 8192, %s30, [#allocation4], 512, 512, 32
    $region13: #{tpu_custom_call.1} parent=1 // pred_fallthru
      _
    // Predicated region
    $region14: #{tpu_custom_call.1} parent=1 // pred_check
      _
    $region15: #{tpu_custom_call.1} parent=1 // pred_check_branch
      %37 = sbr.rel (0) target = $region17
    $region16: #{tpu_custom_call.1} parent=1 // pred_region
      _
    $region17: #{tpu_custom_call.1} parent=1 // pred_fallthru
      _
    // Predicated region
    $region18: #{tpu_custom_call.1} parent=1 // pred_check
      _
    $region19: #{tpu_custom_call.1} parent=1 // pred_check_branch
      %39 = sbr.rel (0) target = $region21
    $region20: #{tpu_custom_call.1} parent=1 // pred_region
      _
    $region21: #{tpu_custom_call.1} parent=1 // pred_fallthru
      _
    // Predicated region
    $region22: #{tpu_custom_call.1} parent=1 // pred_check
      _
    $region23: #{tpu_custom_call.1} parent=1 // pred_check_branch
      %41 = sbr.rel (0) target = $region25
    $region24: #{tpu_custom_call.1} parent=1 // pred_region
      _
    $region25: #{tpu_custom_call.1} parent=1 // pred_fallthru
      _
    // Predicated region
    $region26: #{tpu_custom_call.1} parent=1 // pred_check
      _
    $region27: #{tpu_custom_call.1} parent=1 // pred_check_branch
      %43 = sbr.rel (0) target = $region29
    $region28: #{tpu_custom_call.1} parent=1 // pred_region
      %45 = dma.done [#allocation4], 8192
    $region29: #{tpu_custom_call.1} parent=1 // pred_fallthru
      _
    %v46 = vld [vmem:[%s0] sm:$0xff]
    %v47 = vld [vmem:[%s0 + $0x8] sm:$0xff]
    %v48 = vld [vmem:[%s0 + $0x10] sm:$0xff]
    %v49 = vld [vmem:[%s0 + $0x18] sm:$0xff]
    %v50 = vld [vmem:[%s0 + $0x20] sm:$0xff]
    %v51 = vld [vmem:[%s0 + $0x28] sm:$0xff]
    %v52 = vld [vmem:[%s0 + $0x30] sm:$0xff]
    %v53 = vld [vmem:[%s0 + $0x38] sm:$0xff]
    %v54 = vld [vmem:[%s1] sm:$0xff]
    %v55 = vld [vmem:[%s1 + $0x8] sm:$0xff]
    %v56 = vld [vmem:[%s1 + $0x10] sm:$0xff]
    %v57 = vld [vmem:[%s1 + $0x18] sm:$0xff]
    %v58 = vld [vmem:[%s1 + $0x20] sm:$0x7f]
    %v59 = vld [vmem:[%s1 + $0x28] sm:$0x7f]
    %v60 = vld [vmem:[%s1 + $0x30] sm:$0x7f]
    %v61 = vld [vmem:[%s1 + $0x38] sm:$0x7f]
    %v62 = vld [vmem:[%s3] sm:$0xf]
    %v64 = vperm.slane %v62, 0
    %v65 = vperm.slane %v62, 1
    %v66 = vperm.slane %v62, 2
    %v67 = vperm.slane %v62, 3
    %vm72 = vcmask 121856
    %v74 = vsel %vm72, %v46, 0
    %v77 = vsel %vm72, %v47, 0
    %v80 = vsel %vm72, %v48, 0
    %v83 = vsel %vm72, %v49, 0
    %v86 = vsel %vm72, %v50, 0
    %v89 = vsel %vm72, %v51, 0
    %v92 = vsel %vm72, %v52, 0
    %v95 = vsel %vm72, %v53, 0
    %vm97 = vcmask 1046528
    %v99 = vsel %vm97, %v58, 0
    %v102 = vsel %vm97, %v59, 0
    %v105 = vsel %vm97, %v60, 0
    %v108 = vsel %vm97, %v61, 0
    %110 = vmatpush.msra.mxu0 0.0
    %111 = vmatpush.msra.mxu0 0.0
    %112 = vmatpush.msra.mxu0 0.0
    %113 = vmatpush.msra.mxu0 0.0
    %114 = vmatpush.msra.mxu0 0.0
    %115 = vmatpush.msra.mxu0 0.0
    %116 = vmatpush.msra.mxu0 0.0
    %117 = vmatpush.msra.mxu0 0.0
    %118 = vmatpush.msra.mxu0 0.0
    %119 = vmatpush.msra.mxu0 0.0
    %120 = vmatpush.msra.mxu0 0.0
    %121 = vmatpush.msra.mxu0 0.0
    %122 = vmatpush.msra.mxu0 0.0
    %123 = vmatpush.msra.mxu0 0.0
    %124 = vmatpush.msra.mxu0 %v99
    %125 = vmatpush.msra.mxu0 %v54
    %126 = vmatmul.f32.gmra.mxu0 %v74
    %v127 = vpop.f32.mrf.mxu0
    %v128 = vadd.f32 %v64, %v127
    %129 = vmatmul.f32.gmra.mxu0 %v77
    %v130 = vpop.f32.mrf.mxu0
    %v131 = vadd.f32 %v64, %v130
    %132 = vmatmul.f32.gmra.mxu0 %v80
    %v133 = vpop.f32.mrf.mxu0
    %v134 = vadd.f32 %v64, %v133
    %135 = vmatmul.f32.gmra.mxu0 %v83
    %v136 = vpop.f32.mrf.mxu0
    %v137 = vadd.f32 %v64, %v136
    %138 = vmatmul.f32.gmra.mxu0 %v86
    %v139 = vpop.f32.mrf.mxu0
    %v140 = vadd.f32 %v64, %v139
    %141 = vmatmul.f32.gmra.mxu0 %v89
    %v142 = vpop.f32.mrf.mxu0
    %v143 = vadd.f32 %v64, %v142
    %144 = vmatmul.f32.gmra.mxu0 %v92
    %v145 = vpop.f32.mrf.mxu0
    %v146 = vadd.f32 %v64, %v145
    %147 = vmatmul.f32.gmra.mxu0 %v95
    %v148 = vpop.f32.mrf.mxu0
    %v149 = vadd.f32 %v64, %v148
    %150 = vdwg.mxu0
    %151 = vmatpush.msra.mxu0 0.0
    %152 = vmatpush.msra.mxu0 0.0
    %153 = vmatpush.msra.mxu0 0.0
    %154 = vmatpush.msra.mxu0 0.0
    %155 = vmatpush.msra.mxu0 0.0
    %156 = vmatpush.msra.mxu0 0.0
    %157 = vmatpush.msra.mxu0 0.0
    %158 = vmatpush.msra.mxu0 0.0
    %159 = vmatpush.msra.mxu0 0.0
    %160 = vmatpush.msra.mxu0 0.0
    %161 = vmatpush.msra.mxu0 0.0
    %162 = vmatpush.msra.mxu0 0.0
    %163 = vmatpush.msra.mxu0 0.0
    %164 = vmatpush.msra.mxu0 0.0
    %165 = vmatpush.msra.mxu0 %v102
    %166 = vmatpush.msra.mxu0 %v55
    %167 = vmatmul.f32.gmra.mxu0 %v74
    %v168 = vpop.f32.mrf.mxu0
    %v169 = vadd.f32 %v65, %v168
    %170 = vmatmul.f32.gmra.mxu0 %v77
    %v171 = vpop.f32.mrf.mxu0
    %v172 = vadd.f32 %v65, %v171
    %173 = vmatmul.f32.gmra.mxu0 %v80
    %v174 = vpop.f32.mrf.mxu0
    %v175 = vadd.f32 %v65, %v174
    %176 = vmatmul.f32.gmra.mxu0 %v83
    %v177 = vpop.f32.mrf.mxu0
    %v178 = vadd.f32 %v65, %v177
    %179 = vmatmul.f32.gmra.mxu0 %v86
    %v180 = vpop.f32.mrf.mxu0
    %v181 = vadd.f32 %v65, %v180
    %182 = vmatmul.f32.gmra.mxu0 %v89
    %v183 = vpop.f32.mrf.mxu0
    %v184 = vadd.f32 %v65, %v183
    %185 = vmatmul.f32.gmra.mxu0 %v92
    %v186 = vpop.f32.mrf.mxu0
    %v187 = vadd.f32 %v65, %v186
    %188 = vmatmul.f32.gmra.mxu0 %v95
    %v189 = vpop.f32.mrf.mxu0
    %v190 = vadd.f32 %v65, %v189
    %191 = vdwg.mxu0
    %192 = vmatpush.msra.mxu0 0.0
    %193 = vmatpush.msra.mxu0 0.0
    %194 = vmatpush.msra.mxu0 0.0
    %195 = vmatpush.msra.mxu0 0.0
    %196 = vmatpush.msra.mxu0 0.0
    %197 = vmatpush.msra.mxu0 0.0
    %198 = vmatpush.msra.mxu0 0.0
    %199 = vmatpush.msra.mxu0 0.0
    %200 = vmatpush.msra.mxu0 0.0
    %201 = vmatpush.msra.mxu0 0.0
    %202 = vmatpush.msra.mxu0 0.0
    %203 = vmatpush.msra.mxu0 0.0
    %204 = vmatpush.msra.mxu0 0.0
    %205 = vmatpush.msra.mxu0 0.0
    %206 = vmatpush.msra.mxu0 %v105
    %207 = vmatpush.msra.mxu0 %v56
    %208 = vmatmul.f32.gmra.mxu0 %v74
    %v209 = vpop.f32.mrf.mxu0
    %v210 = vadd.f32 %v66, %v209
    %211 = vmatmul.f32.gmra.mxu0 %v77
    %v212 = vpop.f32.mrf.mxu0
    %v213 = vadd.f32 %v66, %v212
    %214 = vmatmul.f32.gmra.mxu0 %v80
    %v215 = vpop.f32.mrf.mxu0
    %v216 = vadd.f32 %v66, %v215
    %217 = vmatmul.f32.gmra.mxu0 %v83
    %v218 = vpop.f32.mrf.mxu0
    %v219 = vadd.f32 %v66, %v218
    %220 = vmatmul.f32.gmra.mxu0 %v86
    %v221 = vpop.f32.mrf.mxu0
    %v222 = vadd.f32 %v66, %v221
    %223 = vmatmul.f32.gmra.mxu0 %v89
    %v224 = vpop.f32.mrf.mxu0
    %v225 = vadd.f32 %v66, %v224
    %226 = vmatmul.f32.gmra.mxu0 %v92
    %v227 = vpop.f32.mrf.mxu0
    %v228 = vadd.f32 %v66, %v227
    %229 = vmatmul.f32.gmra.mxu0 %v95
    %v230 = vpop.f32.mrf.mxu0
    %v231 = vadd.f32 %v66, %v230
    %232 = vdwg.mxu0
    %233 = vmatpush.msra.mxu0 0.0
    %234 = vmatpush.msra.mxu0 0.0
    %235 = vmatpush.msra.mxu0 0.0
    %236 = vmatpush.msra.mxu0 0.0
    %237 = vmatpush.msra.mxu0 0.0
    %238 = vmatpush.msra.mxu0 0.0
    %239 = vmatpush.msra.mxu0 0.0
    %240 = vmatpush.msra.mxu0 0.0
    %241 = vmatpush.msra.mxu0 0.0
    %242 = vmatpush.msra.mxu0 0.0
    %243 = vmatpush.msra.mxu0 0.0
    %244 = vmatpush.msra.mxu0 0.0
    %245 = vmatpush.msra.mxu0 0.0
    %246 = vmatpush.msra.mxu0 0.0
    %247 = vmatpush.msra.mxu0 %v108
    %248 = vmatpush.msra.mxu0 %v57
    %249 = vmatmul.f32.gmra.mxu0 %v74
    %v250 = vpop.f32.mrf.mxu0
    %v251 = vadd.f32 %v67, %v250
    %252 = vmatmul.f32.gmra.mxu0 %v77
    %v253 = vpop.f32.mrf.mxu0
    %v254 = vadd.f32 %v67, %v253
    %255 = vmatmul.f32.gmra.mxu0 %v80
    %v256 = vpop.f32.mrf.mxu0
    %v257 = vadd.f32 %v67, %v256
    %258 = vmatmul.f32.gmra.mxu0 %v83
    %v259 = vpop.f32.mrf.mxu0
    %v260 = vadd.f32 %v67, %v259
    %261 = vmatmul.f32.gmra.mxu0 %v86
    %v262 = vpop.f32.mrf.mxu0
    %v263 = vadd.f32 %v67, %v262
    %264 = vmatmul.f32.gmra.mxu0 %v89
    %v265 = vpop.f32.mrf.mxu0
    %v266 = vadd.f32 %v67, %v265
    %267 = vmatmul.f32.gmra.mxu0 %v92
    %v268 = vpop.f32.mrf.mxu0
    %v269 = vadd.f32 %v67, %v268
    %270 = vmatmul.f32.gmra.mxu0 %v95
    %v271 = vpop.f32.mrf.mxu0
    %v272 = vadd.f32 %v67, %v271
    %273 = vdwg.mxu0
    %v274 = vld [vmem:[#allocation3] sm:$0xff]
    %v275 = vld [vmem:[#allocation3 + $0x8] sm:$0xff]
    %v276 = vld [vmem:[#allocation3 + $0x10] sm:$0xff]
    %v277 = vld [vmem:[#allocation3 + $0x18] sm:$0xff]
    %v278 = vld [vmem:[#allocation3 + $0x20] sm:$0xff]
    %v279 = vld [vmem:[#allocation3 + $0x28] sm:$0xff]
    %v280 = vld [vmem:[#allocation3 + $0x30] sm:$0xff]
    %v281 = vld [vmem:[#allocation3 + $0x38] sm:$0xff]
    %v282 = vld [vmem:[#allocation3 + $0x40] sm:$0xff]
    %v283 = vld [vmem:[#allocation3 + $0x48] sm:$0xff]
    %v284 = vld [vmem:[#allocation3 + $0x50] sm:$0xff]
    %v285 = vld [vmem:[#allocation3 + $0x58] sm:$0xff]
    %v286 = vld [vmem:[#allocation3 + $0x60] sm:$0xff]
    %v287 = vld [vmem:[#allocation3 + $0x68] sm:$0xff]
    %v288 = vld [vmem:[#allocation3 + $0x70] sm:$0xff]
    %v289 = vld [vmem:[#allocation3 + $0x78] sm:$0xff]
    %v290 = vld [vmem:[#allocation3 + $0x80] sm:$0xff]
    %v291 = vld [vmem:[#allocation3 + $0x88] sm:$0xff]
    %v292 = vld [vmem:[#allocation3 + $0x90] sm:$0xff]
    %v293 = vld [vmem:[#allocation3 + $0x98] sm:$0xff]
    %v294 = vld [vmem:[#allocation3 + $0xa0] sm:$0xff]
    %v295 = vld [vmem:[#allocation3 + $0xa8] sm:$0xff]
    %v296 = vld [vmem:[#allocation3 + $0xb0] sm:$0xff]
    %v297 = vld [vmem:[#allocation3 + $0xb8] sm:$0xff]
    %v298 = vld [vmem:[#allocation3 + $0xc0] sm:$0xff]
    %v299 = vld [vmem:[#allocation3 + $0xc8] sm:$0xff]
    %v300 = vld [vmem:[#allocation3 + $0xd0] sm:$0xff]
    %v301 = vld [vmem:[#allocation3 + $0xd8] sm:$0xff]
    %v302 = vld [vmem:[#allocation3 + $0xe0] sm:$0xff]
    %v303 = vld [vmem:[#allocation3 + $0xe8] sm:$0xff]
    %v304 = vld [vmem:[#allocation3 + $0xf0] sm:$0xff]
    %v305 = vld [vmem:[#allocation3 + $0xf8] sm:$0xff]
    %v306 = vld [vmem:[#allocation3 + $0x100] sm:$0xff]
    %v307 = vld [vmem:[#allocation3 + $0x108] sm:$0xff]
    %v308 = vld [vmem:[#allocation3 + $0x110] sm:$0xff]
    %v309 = vld [vmem:[#allocation3 + $0x118] sm:$0xff]
    %v310 = vld [vmem:[#allocation3 + $0x120] sm:$0xff]
    %v311 = vld [vmem:[#allocation3 + $0x128] sm:$0xff]
    %v312 = vld [vmem:[#allocation3 + $0x130] sm:$0xff]
    %v313 = vld [vmem:[#allocation3 + $0x138] sm:$0xff]
    %v314 = vld [vmem:[#allocation3 + $0x140] sm:$0xff]
    %v315 = vld [vmem:[#allocation3 + $0x148] sm:$0xff]
    %v316 = vld [vmem:[#allocation3 + $0x150] sm:$0xff]
    %v317 = vld [vmem:[#allocation3 + $0x158] sm:$0xff]
    %v318 = vld [vmem:[#allocation3 + $0x160] sm:$0xff]
    %v319 = vld [vmem:[#allocation3 + $0x168] sm:$0xff]
    %v320 = vld [vmem:[#allocation3 + $0x170] sm:$0xff]
    %v321 = vld [vmem:[#allocation3 + $0x178] sm:$0xff]
    %v322 = vld [vmem:[#allocation3 + $0x180] sm:$0xff]
    %v323 = vld [vmem:[#allocation3 + $0x188] sm:$0xff]
    %v324 = vld [vmem:[#allocation3 + $0x190] sm:$0xff]
    %v325 = vld [vmem:[#allocation3 + $0x198] sm:$0xff]
    %v326 = vld [vmem:[#allocation3 + $0x1a0] sm:$0xff]
    %v327 = vld [vmem:[#allocation3 + $0x1a8] sm:$0xff]
    %v328 = vld [vmem:[#allocation3 + $0x1b0] sm:$0xff]
    %v329 = vld [vmem:[#allocation3 + $0x1b8] sm:$0xff]
    %v330 = vld [vmem:[#allocation3 + $0x1c0] sm:$0xff]
    %v331 = vld [vmem:[#allocation3 + $0x1c8] sm:$0xff]
    %v332 = vld [vmem:[#allocation3 + $0x1d0] sm:$0xff]
    %v333 = vld [vmem:[#allocation3 + $0x1d8] sm:$0xff]
    %v334 = vld [vmem:[#allocation3 + $0x1e0] sm:$0xff]
    %v335 = vld [vmem:[#allocation3 + $0x1e8] sm:$0xff]
    %v336 = vld [vmem:[#allocation3 + $0x1f0] sm:$0xff]
    %v337 = vld [vmem:[#allocation3 + $0x1f8] sm:$0xff]
    %v338 = vld [vmem:[%s4] sm:$0x1]
    %339 = vmatpush.msra.mxu0 %v334
    %340 = vmatpush.msra.mxu0 %v330
    %341 = vmatpush.msra.mxu0 %v326
    %342 = vmatpush.msra.mxu0 %v322
    %343 = vmatpush.msra.mxu0 %v318
    %344 = vmatpush.msra.mxu0 %v314
    %345 = vmatpush.msra.mxu0 %v310
    %346 = vmatpush.msra.mxu0 %v306
    %347 = vmatpush.msra.mxu0 %v302
    %348 = vmatpush.msra.mxu0 %v298
    %349 = vmatpush.msra.mxu0 %v294
    %350 = vmatpush.msra.mxu0 %v290
    %351 = vmatpush.msra.mxu0 %v286
    %352 = vmatpush.msra.mxu0 %v282
    %353 = vmatpush.msra.mxu0 %v278
    %354 = vmatpush.msra.mxu0 %v274
    %355 = vmatmul.f32.gmra.mxu0 0.0
    %v356 = vpop.f32.mrf.mxu0
    %v357 = vadd.f32 0.0, %v356
    %358 = vdwg.mxu0
    %359 = vmatpush.msra.mxu0 %v335
    %360 = vmatpush.msra.mxu0 %v331
    %361 = vmatpush.msra.mxu0 %v327
    %362 = vmatpush.msra.mxu0 %v323
    %363 = vmatpush.msra.mxu0 %v319
    %364 = vmatpush.msra.mxu0 %v315
    %365 = vmatpush.msra.mxu0 %v311
    %366 = vmatpush.msra.mxu0 %v307
    %367 = vmatpush.msra.mxu0 %v303
    %368 = vmatpush.msra.mxu0 %v299
    %369 = vmatpush.msra.mxu0 %v295
    %370 = vmatpush.msra.mxu0 %v291
    %371 = vmatpush.msra.mxu0 %v287
    %372 = vmatpush.msra.mxu0 %v283
    %373 = vmatpush.msra.mxu0 %v279
    %374 = vmatpush.msra.mxu0 %v275
    %375 = vmatmul.f32.gmra.mxu0 0.0
    %v376 = vpop.f32.mrf.mxu0
    %v377 = vadd.f32 0.0, %v376
    %378 = vdwg.mxu0
    %379 = vmatpush.msra.mxu0 %v336
    %380 = vmatpush.msra.mxu0 %v332
    %381 = vmatpush.msra.mxu0 %v328
    %382 = vmatpush.msra.mxu0 %v324
    %383 = vmatpush.msra.mxu0 %v320
    %384 = vmatpush.msra.mxu0 %v316
    %385 = vmatpush.msra.mxu0 %v312
    %386 = vmatpush.msra.mxu0 %v308
    %387 = vmatpush.msra.mxu0 %v304
    %388 = vmatpush.msra.mxu0 %v300
    %389 = vmatpush.msra.mxu0 %v296
    %390 = vmatpush.msra.mxu0 %v292
    %391 = vmatpush.msra.mxu0 %v288
    %392 = vmatpush.msra.mxu0 %v284
    %393 = vmatpush.msra.mxu0 %v280
    %394 = vmatpush.msra.mxu0 %v276
    %395 = vmatmul.f32.gmra.mxu0 0.0
    %v396 = vpop.f32.mrf.mxu0
    %v397 = vadd.f32 0.0, %v396
    %398 = vdwg.mxu0
    %399 = vmatpush.msra.mxu0 %v337
    %400 = vmatpush.msra.mxu0 %v333
    %401 = vmatpush.msra.mxu0 %v329
    %402 = vmatpush.msra.mxu0 %v325
    %403 = vmatpush.msra.mxu0 %v321
    %404 = vmatpush.msra.mxu0 %v317
    %405 = vmatpush.msra.mxu0 %v313
    %406 = vmatpush.msra.mxu0 %v309
    %407 = vmatpush.msra.mxu0 %v305
    %408 = vmatpush.msra.mxu0 %v301
    %409 = vmatpush.msra.mxu0 %v297
    %410 = vmatpush.msra.mxu0 %v293
    %411 = vmatpush.msra.mxu0 %v289
    %412 = vmatpush.msra.mxu0 %v285
    %413 = vmatpush.msra.mxu0 %v281
    %414 = vmatpush.msra.mxu0 %v277
    %415 = vmatmul.f32.gmra.mxu0 0.0
    %v416 = vpop.f32.mrf.mxu0
    %v417 = vadd.f32 0.0, %v416
    %418 = vdwg.mxu0
    %v419 = vadd.f32 %v128, %v357
    %v420 = vadd.f32 %v169, %v377
    %v421 = vadd.f32 %v210, %v397
    %v422 = vadd.f32 %v251, %v417
    %v423 = vmul.f32 %v419, 0.5
    %v424 = vmul.f32 %v420, 0.5
    %v425 = vmul.f32 %v421, 0.5
    %v426 = vtanh.pop %v423
    %v427 = vtanh.pop %v424
    %v428 = vtanh.pop %v425
    %v429 = vmul.f32 %v426, 0.5
    %v430 = vmul.f32 %v427, 0.5
    %v431 = vmul.f32 %v428, 0.5
    %v432 = vadd.f32 %v429, 0.5
    %v433 = vadd.f32 %v430, 0.5
    %v434 = vadd.f32 %v431, 0.5
    %v435 = vtanh.pop %v422
    %v436 = vmul.f32 %v433, 0.0
    %v437 = vmul.f32 %v432, %v435
    %v438 = vadd.f32 %v436, %v437
    %v439 = vtanh.pop %v438
    %v440 = vmul.f32 %v434, %v439
    %441 = vmatpush.msra.mxu0 %v334
    %442 = vmatpush.msra.mxu0 %v330
    %443 = vmatpush.msra.mxu0 %v326
    %444 = vmatpush.msra.mxu0 %v322
    %445 = vmatpush.msra.mxu0 %v318
    %446 = vmatpush.msra.mxu0 %v314
    %447 = vmatpush.msra.mxu0 %v310
    %448 = vmatpush.msra.mxu0 %v306
    %449 = vmatpush.msra.mxu0 %v302
    %450 = vmatpush.msra.mxu0 %v298
    %451 = vmatpush.msra.mxu0 %v294
    %452 = vmatpush.msra.mxu0 %v290
    %453 = vmatpush.msra.mxu0 %v286
    %454 = vmatpush.msra.mxu0 %v282
    %455 = vmatpush.msra.mxu0 %v278
    %456 = vmatpush.msra.mxu0 %v274
    %457 = vmatmul.f32.gmra.mxu0 %v440
    %v458 = vpop.f32.mrf.mxu0
    %v459 = vadd.f32 0.0, %v458
    %460 = vdwg.mxu0
    %461 = vmatpush.msra.mxu0 %v335
    %462 = vmatpush.msra.mxu0 %v331
    %463 = vmatpush.msra.mxu0 %v327
    %464 = vmatpush.msra.mxu0 %v323
    %465 = vmatpush.msra.mxu0 %v319
    %466 = vmatpush.msra.mxu0 %v315
    %467 = vmatpush.msra.mxu0 %v311
    %468 = vmatpush.msra.mxu0 %v307
    %469 = vmatpush.msra.mxu0 %v303
    %470 = vmatpush.msra.mxu0 %v299
    %471 = vmatpush.msra.mxu0 %v295
    %472 = vmatpush.msra.mxu0 %v291
    %473 = vmatpush.msra.mxu0 %v287
    %474 = vmatpush.msra.mxu0 %v283
    %475 = vmatpush.msra.mxu0 %v279
    %476 = vmatpush.msra.mxu0 %v275
    %477 = vmatmul.f32.gmra.mxu0 %v440
    %v478 = vpop.f32.mrf.mxu0
    %v479 = vadd.f32 0.0, %v478
    %480 = vdwg.mxu0
    %481 = vmatpush.msra.mxu0 %v336
    %482 = vmatpush.msra.mxu0 %v332
    %483 = vmatpush.msra.mxu0 %v328
    %484 = vmatpush.msra.mxu0 %v324
    %485 = vmatpush.msra.mxu0 %v320
    %486 = vmatpush.msra.mxu0 %v316
    %487 = vmatpush.msra.mxu0 %v312
    %488 = vmatpush.msra.mxu0 %v308
    %489 = vmatpush.msra.mxu0 %v304
    %490 = vmatpush.msra.mxu0 %v300
    %491 = vmatpush.msra.mxu0 %v296
    %492 = vmatpush.msra.mxu0 %v292
    %493 = vmatpush.msra.mxu0 %v288
    %494 = vmatpush.msra.mxu0 %v284
    %495 = vmatpush.msra.mxu0 %v280
    %496 = vmatpush.msra.mxu0 %v276
    %497 = vmatmul.f32.gmra.mxu0 %v440
    %v498 = vpop.f32.mrf.mxu0
    %v499 = vadd.f32 0.0, %v498
    %500 = vdwg.mxu0
    %501 = vmatpush.msra.mxu0 %v337
    %502 = vmatpush.msra.mxu0 %v333
    %503 = vmatpush.msra.mxu0 %v329
    %504 = vmatpush.msra.mxu0 %v325
    %505 = vmatpush.msra.mxu0 %v321
    %506 = vmatpush.msra.mxu0 %v317
    %507 = vmatpush.msra.mxu0 %v313
    %508 = vmatpush.msra.mxu0 %v309
    %509 = vmatpush.msra.mxu0 %v305
    %510 = vmatpush.msra.mxu0 %v301
    %511 = vmatpush.msra.mxu0 %v297
    %512 = vmatpush.msra.mxu0 %v293
    %513 = vmatpush.msra.mxu0 %v289
    %514 = vmatpush.msra.mxu0 %v285
    %515 = vmatpush.msra.mxu0 %v281
    %516 = vmatpush.msra.mxu0 %v277
    %517 = vmatmul.f32.gmra.mxu0 %v440
    %v518 = vpop.f32.mrf.mxu0
    %v519 = vadd.f32 0.0, %v518
    %520 = vdwg.mxu0
    %v521 = vadd.f32 %v131, %v459
    %v522 = vadd.f32 %v172, %v479
    %v523 = vadd.f32 %v213, %v499
    %v524 = vadd.f32 %v254, %v519
    %v525 = vmul.f32 %v521, 0.5
    %v526 = vmul.f32 %v522, 0.5
    %v527 = vmul.f32 %v523, 0.5
    %v528 = vtanh.pop %v525
    %v529 = vtanh.pop %v526
    %v530 = vtanh.pop %v527
    %v531 = vmul.f32 %v528, 0.5
    %v532 = vmul.f32 %v529, 0.5
    %v533 = vmul.f32 %v530, 0.5
    %v534 = vadd.f32 %v531, 0.5
    %v535 = vadd.f32 %v532, 0.5
    %v536 = vadd.f32 %v533, 0.5
    %v537 = vtanh.pop %v524
    %v538 = vmul.f32 %v535, %v438
    %v539 = vmul.f32 %v534, %v537
    %v540 = vadd.f32 %v538, %v539
    %v541 = vtanh.pop %v540
    %v542 = vmul.f32 %v536, %v541
    %543 = vmatpush.msra.mxu0 %v334
    %544 = vmatpush.msra.mxu0 %v330
    %545 = vmatpush.msra.mxu0 %v326
    %546 = vmatpush.msra.mxu0 %v322
    %547 = vmatpush.msra.mxu0 %v318
    %548 = vmatpush.msra.mxu0 %v314
    %549 = vmatpush.msra.mxu0 %v310
    %550 = vmatpush.msra.mxu0 %v306
    %551 = vmatpush.msra.mxu0 %v302
    %552 = vmatpush.msra.mxu0 %v298
    %553 = vmatpush.msra.mxu0 %v294
    %554 = vmatpush.msra.mxu0 %v290
    %555 = vmatpush.msra.mxu0 %v286
    %556 = vmatpush.msra.mxu0 %v282
    %557 = vmatpush.msra.mxu0 %v278
    %558 = vmatpush.msra.mxu0 %v274
    %559 = vmatmul.f32.gmra.mxu0 %v542
    %v560 = vpop.f32.mrf.mxu0
    %v561 = vadd.f32 0.0, %v560
    %562 = vdwg.mxu0
    %563 = vmatpush.msra.mxu0 %v335
    %564 = vmatpush.msra.mxu0 %v331
    %565 = vmatpush.msra.mxu0 %v327
    %566 = vmatpush.msra.mxu0 %v323
    %567 = vmatpush.msra.mxu0 %v319
    %568 = vmatpush.msra.mxu0 %v315
    %569 = vmatpush.msra.mxu0 %v311
    %570 = vmatpush.msra.mxu0 %v307
    %571 = vmatpush.msra.mxu0 %v303
    %572 = vmatpush.msra.mxu0 %v299
    %573 = vmatpush.msra.mxu0 %v295
    %574 = vmatpush.msra.mxu0 %v291
    %575 = vmatpush.msra.mxu0 %v287
    %576 = vmatpush.msra.mxu0 %v283
    %577 = vmatpush.msra.mxu0 %v279
    %578 = vmatpush.msra.mxu0 %v275
    %579 = vmatmul.f32.gmra.mxu0 %v542
    %v580 = vpop.f32.mrf.mxu0
    %v581 = vadd.f32 0.0, %v580
    %582 = vdwg.mxu0
    %583 = vmatpush.msra.mxu0 %v336
    %584 = vmatpush.msra.mxu0 %v332
    %585 = vmatpush.msra.mxu0 %v328
    %586 = vmatpush.msra.mxu0 %v324
    %587 = vmatpush.msra.mxu0 %v320
    %588 = vmatpush.msra.mxu0 %v316
    %589 = vmatpush.msra.mxu0 %v312
    %590 = vmatpush.msra.mxu0 %v308
    %591 = vmatpush.msra.mxu0 %v304
    %592 = vmatpush.msra.mxu0 %v300
    %593 = vmatpush.msra.mxu0 %v296
    %594 = vmatpush.msra.mxu0 %v292
    %595 = vmatpush.msra.mxu0 %v288
    %596 = vmatpush.msra.mxu0 %v284
    %597 = vmatpush.msra.mxu0 %v280
    %598 = vmatpush.msra.mxu0 %v276
    %599 = vmatmul.f32.gmra.mxu0 %v542
    %v600 = vpop.f32.mrf.mxu0
    %v601 = vadd.f32 0.0, %v600
    %602 = vdwg.mxu0
    %603 = vmatpush.msra.mxu0 %v337
    %604 = vmatpush.msra.mxu0 %v333
    %605 = vmatpush.msra.mxu0 %v329
    %606 = vmatpush.msra.mxu0 %v325
    %607 = vmatpush.msra.mxu0 %v321
    %608 = vmatpush.msra.mxu0 %v317
    %609 = vmatpush.msra.mxu0 %v313
    %610 = vmatpush.msra.mxu0 %v309
    %611 = vmatpush.msra.mxu0 %v305
    %612 = vmatpush.msra.mxu0 %v301
    %613 = vmatpush.msra.mxu0 %v297
    %614 = vmatpush.msra.mxu0 %v293
    %615 = vmatpush.msra.mxu0 %v289
    %616 = vmatpush.msra.mxu0 %v285
    %617 = vmatpush.msra.mxu0 %v281
    %618 = vmatpush.msra.mxu0 %v277
    %619 = vmatmul.f32.gmra.mxu0 %v542
    %v620 = vpop.f32.mrf.mxu0
    %v621 = vadd.f32 0.0, %v620
    %622 = vdwg.mxu0
    %v623 = vadd.f32 %v134, %v561
    %v624 = vadd.f32 %v175, %v581
    %v625 = vadd.f32 %v216, %v601
    %v626 = vadd.f32 %v257, %v621
    %v627 = vmul.f32 %v623, 0.5
    %v628 = vmul.f32 %v624, 0.5
    %v629 = vmul.f32 %v625, 0.5
    %v630 = vtanh.pop %v627
    %v631 = vtanh.pop %v628
    %v632 = vtanh.pop %v629
    %v633 = vmul.f32 %v630, 0.5
    %v634 = vmul.f32 %v631, 0.5
    %v635 = vmul.f32 %v632, 0.5
    %v636 = vadd.f32 %v633, 0.5
    %v637 = vadd.f32 %v634, 0.5
    %v638 = vadd.f32 %v635, 0.5
    %v639 = vtanh.pop %v626
    %v640 = vmul.f32 %v637, %v540
    %v641 = vmul.f32 %v636, %v639
    %v642 = vadd.f32 %v640, %v641
    %v643 = vtanh.pop %v642
    %v644 = vmul.f32 %v638, %v643
    %645 = vmatpush.msra.mxu0 %v334
    %646 = vmatpush.msra.mxu0 %v330
    %647 = vmatpush.msra.mxu0 %v326
    %648 = vmatpush.msra.mxu0 %v322
    %649 = vmatpush.msra.mxu0 %v318
    %650 = vmatpush.msra.mxu0 %v314
    %651 = vmatpush.msra.mxu0 %v310
    %652 = vmatpush.msra.mxu0 %v306
    %653 = vmatpush.msra.mxu0 %v302
    %654 = vmatpush.msra.mxu0 %v298
    %655 = vmatpush.msra.mxu0 %v294
    %656 = vmatpush.msra.mxu0 %v290
    %657 = vmatpush.msra.mxu0 %v286
    %658 = vmatpush.msra.mxu0 %v282
    %659 = vmatpush.msra.mxu0 %v278
    %660 = vmatpush.msra.mxu0 %v274
    %661 = vmatmul.f32.gmra.mxu0 %v644
    %v662 = vpop.f32.mrf.mxu0
    %v663 = vadd.f32 0.0, %v662
    %664 = vdwg.mxu0
    %665 = vmatpush.msra.mxu0 %v335
    %666 = vmatpush.msra.mxu0 %v331
    %667 = vmatpush.msra.mxu0 %v327
    %668 = vmatpush.msra.mxu0 %v323
    %669 = vmatpush.msra.mxu0 %v319
    %670 = vmatpush.msra.mxu0 %v315
    %671 = vmatpush.msra.mxu0 %v311
    %672 = vmatpush.msra.mxu0 %v307
    %673 = vmatpush.msra.mxu0 %v303
    %674 = vmatpush.msra.mxu0 %v299
    %675 = vmatpush.msra.mxu0 %v295
    %676 = vmatpush.msra.mxu0 %v291
    %677 = vmatpush.msra.mxu0 %v287
    %678 = vmatpush.msra.mxu0 %v283
    %679 = vmatpush.msra.mxu0 %v279
    %680 = vmatpush.msra.mxu0 %v275
    %681 = vmatmul.f32.gmra.mxu0 %v644
    %v682 = vpop.f32.mrf.mxu0
    %v683 = vadd.f32 0.0, %v682
    %684 = vdwg.mxu0
    %685 = vmatpush.msra.mxu0 %v336
    %686 = vmatpush.msra.mxu0 %v332
    %687 = vmatpush.msra.mxu0 %v328
    %688 = vmatpush.msra.mxu0 %v324
    %689 = vmatpush.msra.mxu0 %v320
    %690 = vmatpush.msra.mxu0 %v316
    %691 = vmatpush.msra.mxu0 %v312
    %692 = vmatpush.msra.mxu0 %v308
    %693 = vmatpush.msra.mxu0 %v304
    %694 = vmatpush.msra.mxu0 %v300
    %695 = vmatpush.msra.mxu0 %v296
    %696 = vmatpush.msra.mxu0 %v292
    %697 = vmatpush.msra.mxu0 %v288
    %698 = vmatpush.msra.mxu0 %v284
    %699 = vmatpush.msra.mxu0 %v280
    %700 = vmatpush.msra.mxu0 %v276
    %701 = vmatmul.f32.gmra.mxu0 %v644
    %v702 = vpop.f32.mrf.mxu0
    %v703 = vadd.f32 0.0, %v702
    %704 = vdwg.mxu0
    %705 = vmatpush.msra.mxu0 %v337
    %706 = vmatpush.msra.mxu0 %v333
    %707 = vmatpush.msra.mxu0 %v329
    %708 = vmatpush.msra.mxu0 %v325
    %709 = vmatpush.msra.mxu0 %v321
    %710 = vmatpush.msra.mxu0 %v317
    %711 = vmatpush.msra.mxu0 %v313
    %712 = vmatpush.msra.mxu0 %v309
    %713 = vmatpush.msra.mxu0 %v305
    %714 = vmatpush.msra.mxu0 %v301
    %715 = vmatpush.msra.mxu0 %v297
    %716 = vmatpush.msra.mxu0 %v293
    %717 = vmatpush.msra.mxu0 %v289
    %718 = vmatpush.msra.mxu0 %v285
    %719 = vmatpush.msra.mxu0 %v281
    %720 = vmatpush.msra.mxu0 %v277
    %721 = vmatmul.f32.gmra.mxu0 %v644
    %v722 = vpop.f32.mrf.mxu0
    %v723 = vadd.f32 0.0, %v722
    %724 = vdwg.mxu0
    %v725 = vadd.f32 %v137, %v663
    %v726 = vadd.f32 %v178, %v683
    %v727 = vadd.f32 %v219, %v703
    %v728 = vadd.f32 %v260, %v723
    %v729 = vmul.f32 %v725, 0.5
    %v730 = vmul.f32 %v726, 0.5
    %v731 = vmul.f32 %v727, 0.5
    %v732 = vtanh.pop %v729
    %v733 = vtanh.pop %v730
    %v734 = vtanh.pop %v731
    %v735 = vmul.f32 %v732, 0.5
    %v736 = vmul.f32 %v733, 0.5
    %v737 = vmul.f32 %v734, 0.5
    %v738 = vadd.f32 %v735, 0.5
    %v739 = vadd.f32 %v736, 0.5
    %v740 = vadd.f32 %v737, 0.5
    %v741 = vtanh.pop %v728
    %v742 = vmul.f32 %v739, %v642
    %v743 = vmul.f32 %v738, %v741
    %v744 = vadd.f32 %v742, %v743
    %v745 = vtanh.pop %v744
    %v746 = vmul.f32 %v740, %v745
    %747 = vmatpush.msra.mxu0 %v334
    %748 = vmatpush.msra.mxu0 %v330
    %749 = vmatpush.msra.mxu0 %v326
    %750 = vmatpush.msra.mxu0 %v322
    %751 = vmatpush.msra.mxu0 %v318
    %752 = vmatpush.msra.mxu0 %v314
    %753 = vmatpush.msra.mxu0 %v310
    %754 = vmatpush.msra.mxu0 %v306
    %755 = vmatpush.msra.mxu0 %v302
    %756 = vmatpush.msra.mxu0 %v298
    %757 = vmatpush.msra.mxu0 %v294
    %758 = vmatpush.msra.mxu0 %v290
    %759 = vmatpush.msra.mxu0 %v286
    %760 = vmatpush.msra.mxu0 %v282
    %761 = vmatpush.msra.mxu0 %v278
    %762 = vmatpush.msra.mxu0 %v274
    %763 = vmatmul.f32.gmra.mxu0 %v746
    %v764 = vpop.f32.mrf.mxu0
    %v765 = vadd.f32 0.0, %v764
    %766 = vdwg.mxu0
    %767 = vmatpush.msra.mxu0 %v335
    %768 = vmatpush.msra.mxu0 %v331
    %769 = vmatpush.msra.mxu0 %v327
    %770 = vmatpush.msra.mxu0 %v323
    %771 = vmatpush.msra.mxu0 %v319
    %772 = vmatpush.msra.mxu0 %v315
    %773 = vmatpush.msra.mxu0 %v311
    %774 = vmatpush.msra.mxu0 %v307
    %775 = vmatpush.msra.mxu0 %v303
    %776 = vmatpush.msra.mxu0 %v299
    %777 = vmatpush.msra.mxu0 %v295
    %778 = vmatpush.msra.mxu0 %v291
    %779 = vmatpush.msra.mxu0 %v287
    %780 = vmatpush.msra.mxu0 %v283
    %781 = vmatpush.msra.mxu0 %v279
    %782 = vmatpush.msra.mxu0 %v275
    %783 = vmatmul.f32.gmra.mxu0 %v746
    %v784 = vpop.f32.mrf.mxu0
    %v785 = vadd.f32 0.0, %v784
    %786 = vdwg.mxu0
    %787 = vmatpush.msra.mxu0 %v336
    %788 = vmatpush.msra.mxu0 %v332
    %789 = vmatpush.msra.mxu0 %v328
    %790 = vmatpush.msra.mxu0 %v324
    %791 = vmatpush.msra.mxu0 %v320
    %792 = vmatpush.msra.mxu0 %v316
    %793 = vmatpush.msra.mxu0 %v312
    %794 = vmatpush.msra.mxu0 %v308
    %795 = vmatpush.msra.mxu0 %v304
    %796 = vmatpush.msra.mxu0 %v300
    %797 = vmatpush.msra.mxu0 %v296
    %798 = vmatpush.msra.mxu0 %v292
    %799 = vmatpush.msra.mxu0 %v288
    %800 = vmatpush.msra.mxu0 %v284
    %801 = vmatpush.msra.mxu0 %v280
    %802 = vmatpush.msra.mxu0 %v276
    %803 = vmatmul.f32.gmra.mxu0 %v746
    %v804 = vpop.f32.mrf.mxu0
    %v805 = vadd.f32 0.0, %v804
    %806 = vdwg.mxu0
    %807 = vmatpush.msra.mxu0 %v337
    %808 = vmatpush.msra.mxu0 %v333
    %809 = vmatpush.msra.mxu0 %v329
    %810 = vmatpush.msra.mxu0 %v325
    %811 = vmatpush.msra.mxu0 %v321
    %812 = vmatpush.msra.mxu0 %v317
    %813 = vmatpush.msra.mxu0 %v313
    %814 = vmatpush.msra.mxu0 %v309
    %815 = vmatpush.msra.mxu0 %v305
    %816 = vmatpush.msra.mxu0 %v301
    %817 = vmatpush.msra.mxu0 %v297
    %818 = vmatpush.msra.mxu0 %v293
    %819 = vmatpush.msra.mxu0 %v289
    %820 = vmatpush.msra.mxu0 %v285
    %821 = vmatpush.msra.mxu0 %v281
    %822 = vmatpush.msra.mxu0 %v277
    %823 = vmatmul.f32.gmra.mxu0 %v746
    %v824 = vpop.f32.mrf.mxu0
    %v825 = vadd.f32 0.0, %v824
    %826 = vdwg.mxu0
    %v827 = vadd.f32 %v140, %v765
    %v828 = vadd.f32 %v181, %v785
    %v829 = vadd.f32 %v222, %v805
    %v830 = vadd.f32 %v263, %v825
    %v831 = vmul.f32 %v827, 0.5
    %v832 = vmul.f32 %v828, 0.5
    %v833 = vmul.f32 %v829, 0.5
    %v834 = vtanh.pop %v831
    %v835 = vtanh.pop %v832
    %v836 = vtanh.pop %v833
    %v837 = vmul.f32 %v834, 0.5
    %v838 = vmul.f32 %v835, 0.5
    %v839 = vmul.f32 %v836, 0.5
    %v840 = vadd.f32 %v837, 0.5
    %v841 = vadd.f32 %v838, 0.5
    %v842 = vadd.f32 %v839, 0.5
    %v843 = vtanh.pop %v830
    %v844 = vmul.f32 %v841, %v744
    %v845 = vmul.f32 %v840, %v843
    %v846 = vadd.f32 %v844, %v845
    %v847 = vtanh.pop %v846
    %v848 = vmul.f32 %v842, %v847
    %849 = vmatpush.msra.mxu0 %v334
    %850 = vmatpush.msra.mxu0 %v330
    %851 = vmatpush.msra.mxu0 %v326
    %852 = vmatpush.msra.mxu0 %v322
    %853 = vmatpush.msra.mxu0 %v318
    %854 = vmatpush.msra.mxu0 %v314
    %855 = vmatpush.msra.mxu0 %v310
    %856 = vmatpush.msra.mxu0 %v306
    %857 = vmatpush.msra.mxu0 %v302
    %858 = vmatpush.msra.mxu0 %v298
    %859 = vmatpush.msra.mxu0 %v294
    %860 = vmatpush.msra.mxu0 %v290
    %861 = vmatpush.msra.mxu0 %v286
    %862 = vmatpush.msra.mxu0 %v282
    %863 = vmatpush.msra.mxu0 %v278
    %864 = vmatpush.msra.mxu0 %v274
    %865 = vmatmul.f32.gmra.mxu0 %v848
    %v866 = vpop.f32.mrf.mxu0
    %v867 = vadd.f32 0.0, %v866
    %868 = vdwg.mxu0
    %869 = vmatpush.msra.mxu0 %v335
    %870 = vmatpush.msra.mxu0 %v331
    %871 = vmatpush.msra.mxu0 %v327
    %872 = vmatpush.msra.mxu0 %v323
    %873 = vmatpush.msra.mxu0 %v319
    %874 = vmatpush.msra.mxu0 %v315
    %875 = vmatpush.msra.mxu0 %v311
    %876 = vmatpush.msra.mxu0 %v307
    %877 = vmatpush.msra.mxu0 %v303
    %878 = vmatpush.msra.mxu0 %v299
    %879 = vmatpush.msra.mxu0 %v295
    %880 = vmatpush.msra.mxu0 %v291
    %881 = vmatpush.msra.mxu0 %v287
    %882 = vmatpush.msra.mxu0 %v283
    %883 = vmatpush.msra.mxu0 %v279
    %884 = vmatpush.msra.mxu0 %v275
    %885 = vmatmul.f32.gmra.mxu0 %v848
    %v886 = vpop.f32.mrf.mxu0
    %v887 = vadd.f32 0.0, %v886
    %888 = vdwg.mxu0
    %889 = vmatpush.msra.mxu0 %v336
    %890 = vmatpush.msra.mxu0 %v332
    %891 = vmatpush.msra.mxu0 %v328
    %892 = vmatpush.msra.mxu0 %v324
    %893 = vmatpush.msra.mxu0 %v320
    %894 = vmatpush.msra.mxu0 %v316
    %895 = vmatpush.msra.mxu0 %v312
    %896 = vmatpush.msra.mxu0 %v308
    %897 = vmatpush.msra.mxu0 %v304
    %898 = vmatpush.msra.mxu0 %v300
    %899 = vmatpush.msra.mxu0 %v296
    %900 = vmatpush.msra.mxu0 %v292
    %901 = vmatpush.msra.mxu0 %v288
    %902 = vmatpush.msra.mxu0 %v284
    %903 = vmatpush.msra.mxu0 %v280
    %904 = vmatpush.msra.mxu0 %v276
    %905 = vmatmul.f32.gmra.mxu0 %v848
    %v906 = vpop.f32.mrf.mxu0
    %v907 = vadd.f32 0.0, %v906
    %908 = vdwg.mxu0
    %909 = vmatpush.msra.mxu0 %v337
    %910 = vmatpush.msra.mxu0 %v333
    %911 = vmatpush.msra.mxu0 %v329
    %912 = vmatpush.msra.mxu0 %v325
    %913 = vmatpush.msra.mxu0 %v321
    %914 = vmatpush.msra.mxu0 %v317
    %915 = vmatpush.msra.mxu0 %v313
    %916 = vmatpush.msra.mxu0 %v309
    %917 = vmatpush.msra.mxu0 %v305
    %918 = vmatpush.msra.mxu0 %v301
    %919 = vmatpush.msra.mxu0 %v297
    %920 = vmatpush.msra.mxu0 %v293
    %921 = vmatpush.msra.mxu0 %v289
    %922 = vmatpush.msra.mxu0 %v285
    %923 = vmatpush.msra.mxu0 %v281
    %924 = vmatpush.msra.mxu0 %v277
    %925 = vmatmul.f32.gmra.mxu0 %v848
    %v926 = vpop.f32.mrf.mxu0
    %v927 = vadd.f32 0.0, %v926
    %928 = vdwg.mxu0
    %v929 = vadd.f32 %v143, %v867
    %v930 = vadd.f32 %v184, %v887
    %v931 = vadd.f32 %v225, %v907
    %v932 = vadd.f32 %v266, %v927
    %v933 = vmul.f32 %v929, 0.5
    %v934 = vmul.f32 %v930, 0.5
    %v935 = vmul.f32 %v931, 0.5
    %v936 = vtanh.pop %v933
    %v937 = vtanh.pop %v934
    %v938 = vtanh.pop %v935
    %v939 = vmul.f32 %v936, 0.5
    %v940 = vmul.f32 %v937, 0.5
    %v941 = vmul.f32 %v938, 0.5
    %v942 = vadd.f32 %v939, 0.5
    %v943 = vadd.f32 %v940, 0.5
    %v944 = vadd.f32 %v941, 0.5
    %v945 = vtanh.pop %v932
    %v946 = vmul.f32 %v943, %v846
    %v947 = vmul.f32 %v942, %v945
    %v948 = vadd.f32 %v946, %v947
    %v949 = vtanh.pop %v948
    %v950 = vmul.f32 %v944, %v949
    %951 = vmatpush.msra.mxu0 %v334
    %952 = vmatpush.msra.mxu0 %v330
    %953 = vmatpush.msra.mxu0 %v326
    %954 = vmatpush.msra.mxu0 %v322
    %955 = vmatpush.msra.mxu0 %v318
    %956 = vmatpush.msra.mxu0 %v314
    %957 = vmatpush.msra.mxu0 %v310
    %958 = vmatpush.msra.mxu0 %v306
    %959 = vmatpush.msra.mxu0 %v302
    %960 = vmatpush.msra.mxu0 %v298
    %961 = vmatpush.msra.mxu0 %v294
    %962 = vmatpush.msra.mxu0 %v290
    %963 = vmatpush.msra.mxu0 %v286
    %964 = vmatpush.msra.mxu0 %v282
    %965 = vmatpush.msra.mxu0 %v278
    %966 = vmatpush.msra.mxu0 %v274
    %967 = vmatmul.f32.gmra.mxu0 %v950
    %v968 = vpop.f32.mrf.mxu0
    %v969 = vadd.f32 0.0, %v968
    %970 = vdwg.mxu0
    %971 = vmatpush.msra.mxu0 %v335
    %972 = vmatpush.msra.mxu0 %v331
    %973 = vmatpush.msra.mxu0 %v327
    %974 = vmatpush.msra.mxu0 %v323
    %975 = vmatpush.msra.mxu0 %v319
    %976 = vmatpush.msra.mxu0 %v315
    %977 = vmatpush.msra.mxu0 %v311
    %978 = vmatpush.msra.mxu0 %v307
    %979 = vmatpush.msra.mxu0 %v303
    %980 = vmatpush.msra.mxu0 %v299
    %981 = vmatpush.msra.mxu0 %v295
    %982 = vmatpush.msra.mxu0 %v291
    %983 = vmatpush.msra.mxu0 %v287
    %984 = vmatpush.msra.mxu0 %v283
    %985 = vmatpush.msra.mxu0 %v279
    %986 = vmatpush.msra.mxu0 %v275
    %987 = vmatmul.f32.gmra.mxu0 %v950
    %v988 = vpop.f32.mrf.mxu0
    %v989 = vadd.f32 0.0, %v988
    %990 = vdwg.mxu0
    %991 = vmatpush.msra.mxu0 %v336
    %992 = vmatpush.msra.mxu0 %v332
    %993 = vmatpush.msra.mxu0 %v328
    %994 = vmatpush.msra.mxu0 %v324
    %995 = vmatpush.msra.mxu0 %v320
    %996 = vmatpush.msra.mxu0 %v316
    %997 = vmatpush.msra.mxu0 %v312
    %998 = vmatpush.msra.mxu0 %v308
    %999 = vmatpush.msra.mxu0 %v304
    %1000 = vmatpush.msra.mxu0 %v300
    %1001 = vmatpush.msra.mxu0 %v296
    %1002 = vmatpush.msra.mxu0 %v292
    %1003 = vmatpush.msra.mxu0 %v288
    %1004 = vmatpush.msra.mxu0 %v284
    %1005 = vmatpush.msra.mxu0 %v280
    %1006 = vmatpush.msra.mxu0 %v276
    %1007 = vmatmul.f32.gmra.mxu0 %v950
    %v1008 = vpop.f32.mrf.mxu0
    %v1009 = vadd.f32 0.0, %v1008
    %1010 = vdwg.mxu0
    %1011 = vmatpush.msra.mxu0 %v337
    %1012 = vmatpush.msra.mxu0 %v333
    %1013 = vmatpush.msra.mxu0 %v329
    %1014 = vmatpush.msra.mxu0 %v325
    %1015 = vmatpush.msra.mxu0 %v321
    %1016 = vmatpush.msra.mxu0 %v317
    %1017 = vmatpush.msra.mxu0 %v313
    %1018 = vmatpush.msra.mxu0 %v309
    %1019 = vmatpush.msra.mxu0 %v305
    %1020 = vmatpush.msra.mxu0 %v301
    %1021 = vmatpush.msra.mxu0 %v297
    %1022 = vmatpush.msra.mxu0 %v293
    %1023 = vmatpush.msra.mxu0 %v289
    %1024 = vmatpush.msra.mxu0 %v285
    %1025 = vmatpush.msra.mxu0 %v281
    %1026 = vmatpush.msra.mxu0 %v277
    %1027 = vmatmul.f32.gmra.mxu0 %v950
    %v1028 = vpop.f32.mrf.mxu0
    %v1029 = vadd.f32 0.0, %v1028
    %1030 = vdwg.mxu0
    %v1031 = vadd.f32 %v146, %v969
    %v1032 = vadd.f32 %v187, %v989
    %v1033 = vadd.f32 %v228, %v1009
    %v1034 = vadd.f32 %v269, %v1029
    %v1035 = vmul.f32 %v1031, 0.5
    %v1036 = vmul.f32 %v1032, 0.5
    %v1037 = vmul.f32 %v1033, 0.5
    %v1038 = vtanh.pop %v1035
    %v1039 = vtanh.pop %v1036
    %v1040 = vtanh.pop %v1037
    %v1041 = vmul.f32 %v1038, 0.5
    %v1042 = vmul.f32 %v1039, 0.5
    %v1043 = vmul.f32 %v1040, 0.5
    %v1044 = vadd.f32 %v1041, 0.5
    %v1045 = vadd.f32 %v1042, 0.5
    %v1046 = vadd.f32 %v1043, 0.5
    %v1047 = vtanh.pop %v1034
    %v1048 = vmul.f32 %v1045, %v948
    %v1049 = vmul.f32 %v1044, %v1047
    %v1050 = vadd.f32 %v1048, %v1049
    %v1051 = vtanh.pop %v1050
    %v1052 = vmul.f32 %v1046, %v1051
    %1053 = vmatpush.msra.mxu0 %v334
    %1054 = vmatpush.msra.mxu0 %v330
    %1055 = vmatpush.msra.mxu0 %v326
    %1056 = vmatpush.msra.mxu0 %v322
    %1057 = vmatpush.msra.mxu0 %v318
    %1058 = vmatpush.msra.mxu0 %v314
    %1059 = vmatpush.msra.mxu0 %v310
    %1060 = vmatpush.msra.mxu0 %v306
    %1061 = vmatpush.msra.mxu0 %v302
    %1062 = vmatpush.msra.mxu0 %v298
    %1063 = vmatpush.msra.mxu0 %v294
    %1064 = vmatpush.msra.mxu0 %v290
    %1065 = vmatpush.msra.mxu0 %v286
    %1066 = vmatpush.msra.mxu0 %v282
    %1067 = vmatpush.msra.mxu0 %v278
    %1068 = vmatpush.msra.mxu0 %v274
    %1069 = vmatmul.f32.gmra.mxu0 %v1052
    %v1070 = vpop.f32.mrf.mxu0
    %v1071 = vadd.f32 0.0, %v1070
    %1072 = vdwg.mxu0
    %1073 = vmatpush.msra.mxu0 %v335
    %1074 = vmatpush.msra.mxu0 %v331
    %1075 = vmatpush.msra.mxu0 %v327
    %1076 = vmatpush.msra.mxu0 %v323
    %1077 = vmatpush.msra.mxu0 %v319
    %1078 = vmatpush.msra.mxu0 %v315
    %1079 = vmatpush.msra.mxu0 %v311
    %1080 = vmatpush.msra.mxu0 %v307
    %1081 = vmatpush.msra.mxu0 %v303
    %1082 = vmatpush.msra.mxu0 %v299
    %1083 = vmatpush.msra.mxu0 %v295
    %1084 = vmatpush.msra.mxu0 %v291
    %1085 = vmatpush.msra.mxu0 %v287
    %1086 = vmatpush.msra.mxu0 %v283
    %1087 = vmatpush.msra.mxu0 %v279
    %1088 = vmatpush.msra.mxu0 %v275
    %1089 = vmatmul.f32.gmra.mxu0 %v1052
    %v1090 = vpop.f32.mrf.mxu0
    %v1091 = vadd.f32 0.0, %v1090
    %1092 = vdwg.mxu0
    %1093 = vmatpush.msra.mxu0 %v336
    %1094 = vmatpush.msra.mxu0 %v332
    %1095 = vmatpush.msra.mxu0 %v328
    %1096 = vmatpush.msra.mxu0 %v324
    %1097 = vmatpush.msra.mxu0 %v320
    %1098 = vmatpush.msra.mxu0 %v316
    %1099 = vmatpush.msra.mxu0 %v312
    %1100 = vmatpush.msra.mxu0 %v308
    %1101 = vmatpush.msra.mxu0 %v304
    %1102 = vmatpush.msra.mxu0 %v300
    %1103 = vmatpush.msra.mxu0 %v296
    %1104 = vmatpush.msra.mxu0 %v292
    %1105 = vmatpush.msra.mxu0 %v288
    %1106 = vmatpush.msra.mxu0 %v284
    %1107 = vmatpush.msra.mxu0 %v280
    %1108 = vmatpush.msra.mxu0 %v276
    %1109 = vmatmul.f32.gmra.mxu0 %v1052
    %v1110 = vpop.f32.mrf.mxu0
    %v1111 = vadd.f32 0.0, %v1110
    %1112 = vdwg.mxu0
    %1113 = vmatpush.msra.mxu0 %v337
    %1114 = vmatpush.msra.mxu0 %v333
    %1115 = vmatpush.msra.mxu0 %v329
    %1116 = vmatpush.msra.mxu0 %v325
    %1117 = vmatpush.msra.mxu0 %v321
    %1118 = vmatpush.msra.mxu0 %v317
    %1119 = vmatpush.msra.mxu0 %v313
    %1120 = vmatpush.msra.mxu0 %v309
    %1121 = vmatpush.msra.mxu0 %v305
    %1122 = vmatpush.msra.mxu0 %v301
    %1123 = vmatpush.msra.mxu0 %v297
    %1124 = vmatpush.msra.mxu0 %v293
    %1125 = vmatpush.msra.mxu0 %v289
    %1126 = vmatpush.msra.mxu0 %v285
    %1127 = vmatpush.msra.mxu0 %v281
    %1128 = vmatpush.msra.mxu0 %v277
    %1129 = vmatmul.f32.gmra.mxu0 %v1052
    %v1130 = vpop.f32.mrf.mxu0
    %v1131 = vadd.f32 0.0, %v1130
    %1132 = vdwg.mxu0
    %v1133 = vadd.f32 %v149, %v1071
    %v1134 = vadd.f32 %v190, %v1091
    %v1135 = vadd.f32 %v231, %v1111
    %v1136 = vadd.f32 %v272, %v1131
    %v1137 = vmul.f32 %v1133, 0.5
    %v1138 = vmul.f32 %v1134, 0.5
    %v1139 = vmul.f32 %v1135, 0.5
    %v1140 = vtanh.pop %v1137
    %v1141 = vtanh.pop %v1138
    %v1142 = vtanh.pop %v1139
    %v1143 = vmul.f32 %v1140, 0.5
    %v1144 = vmul.f32 %v1141, 0.5
    %v1145 = vmul.f32 %v1142, 0.5
    %v1146 = vadd.f32 %v1143, 0.5
    %v1147 = vadd.f32 %v1144, 0.5
    %v1148 = vadd.f32 %v1145, 0.5
    %v1149 = vtanh.pop %v1136
    %v1150 = vmul.f32 %v1147, %v1050
    %v1151 = vmul.f32 %v1146, %v1149
    %v1152 = vadd.f32 %v1150, %v1151
    %v1153 = vtanh.pop %v1152
    %v1154 = vmul.f32 %v1148, %v1153
    %v1156 = vperm.slane %v338, 0
    %v1158 = vmul.f32 %v440, %v1156
    %v1159 = vmul.f32 %v542, %v1156
    %v1160 = vmul.f32 %v644, %v1156
    %v1161 = vmul.f32 %v746, %v1156
    %v1162 = vmul.f32 %v848, %v1156
    %v1163 = vmul.f32 %v950, %v1156
    %v1164 = vmul.f32 %v1052, %v1156
    %v1165 = vmul.f32 %v1154, %v1156
    %1166 = vadd.xlane.f32.xlu0 %v1158
    %v1167 = vpop.xlane.xlu0 %1166
    %1168 = vadd.xlane.f32.xlu0 %v1159
    %v1169 = vpop.xlane.xlu0 %1168
    %1170 = vadd.xlane.f32.xlu0 %v1160
    %v1171 = vpop.xlane.xlu0 %1170
    %1172 = vadd.xlane.f32.xlu0 %v1161
    %v1173 = vpop.xlane.xlu0 %1172
    %1174 = vadd.xlane.f32.xlu0 %v1162
    %v1175 = vpop.xlane.xlu0 %1174
    %1176 = vadd.xlane.f32.xlu0 %v1163
    %v1177 = vpop.xlane.xlu0 %1176
    %1178 = vadd.xlane.f32.xlu0 %v1164
    %v1179 = vpop.xlane.xlu0 %1178
    %1180 = vadd.xlane.f32.xlu0 %v1165
    %v1181 = vpop.xlane.xlu0 %1180
    %v1182 = vld [vmem:[#allocation2] sm:$0x1]
    %v1184 = vperm.slane %v1182, 0
    %v1186 = vadd.f32 %v1167, %v1184
    %v1187 = vadd.f32 %v1169, %v1184
    %v1188 = vadd.f32 %v1171, %v1184
    %v1189 = vadd.f32 %v1173, %v1184
    %v1190 = vadd.f32 %v1175, %v1184
    %v1191 = vadd.f32 %v1177, %v1184
    %v1192 = vadd.f32 %v1179, %v1184
    %v1193 = vadd.f32 %v1181, %v1184
    %vm1194 = vcmask 7168
    %1195 = vst.msk [vmem:[%s6] sm:$0xff] %vm1194, %v1186
    %1196 = vst.msk [vmem:[%s6 + $0x8] sm:$0xff] %vm1194, %v1187
    %1197 = vst.msk [vmem:[%s6 + $0x10] sm:$0xff] %vm1194, %v1188
    %1198 = vst.msk [vmem:[%s6 + $0x18] sm:$0xff] %vm1194, %v1189
    %1199 = vst.msk [vmem:[%s6 + $0x20] sm:$0xff] %vm1194, %v1190
    %1200 = vst.msk [vmem:[%s6 + $0x28] sm:$0xff] %vm1194, %v1191
    %1201 = vst.msk [vmem:[%s6 + $0x30] sm:$0xff] %vm1194, %v1192
    %1202 = vst.msk [vmem:[%s6 + $0x38] sm:$0xff] %vm1194, %v1193
    %1203 = vst [vmem:[#allocation6] sm:$0xff] %v1154
    %1204 = vst [vmem:[#allocation7] sm:$0xff] %v1152
    // Predicated region
    $region30: #{tpu_custom_call.1} parent=1 // pred_check
      _
    $region31: #{tpu_custom_call.1} parent=1 // pred_check_branch
      %1206 = sbr.rel (0) target = $region33
    $region32: #{tpu_custom_call.1} parent=1 // pred_region
      _
    $region33: #{tpu_custom_call.1} parent=1 // pred_fallthru
      _
    // Predicated region
    $region34: #{tpu_custom_call.1} parent=1 // pred_check
      _
    $region35: #{tpu_custom_call.1} parent=1 // pred_check_branch
      %1208 = sbr.rel (0) target = $region37
    $region36: #{tpu_custom_call.1} parent=1 // pred_region
      %1210 = vsyncadd [#allocation5], 0
      %s1212 = sshll.u32 [#allocation6], 4
      %s1213 = int_to_ptr.vmem [resolvable:$true] %s1212
      %s1214 = sshll.u32 %s7, 4
      %s1215 = int_to_ptr.hbm [resolvable:$true] %s1214
      %1217 = dma.vmem_to_hbm [thread:$0]  %s1213, 128, %s1215, [#allocation5]
    $region37: #{tpu_custom_call.1} parent=1 // pred_fallthru
      _
    // Predicated region
    $region38: #{tpu_custom_call.1} parent=1 // pred_check
      _
    $region39: #{tpu_custom_call.1} parent=1 // pred_check_branch
      %1219 = sbr.rel (0) target = $region41
    $region40: #{tpu_custom_call.1} parent=1 // pred_region
      %1221 = vsyncadd [#allocation8], 0
      %s1223 = sshll.u32 [#allocation7], 4
      %s1224 = int_to_ptr.vmem [resolvable:$true] %s1223
      %s1225 = sshll.u32 %s8, 4
      %s1226 = int_to_ptr.hbm [resolvable:$true] %s1225
      %1228 = dma.vmem_to_hbm [thread:$0]  %s1224, 128, %s1226, [#allocation8]
    $region41: #{tpu_custom_call.1} parent=1 // pred_fallthru
      _
    // Predicated region
    $region42: #{tpu_custom_call.1} parent=1 // pred_check
      _
    $region43: #{tpu_custom_call.1} parent=1 // pred_check_branch
      %1230 = sbr.rel (0) target = $region45
    $region44: #{tpu_custom_call.1} parent=1 // pred_region
      _
    $region45: #{tpu_custom_call.1} parent=1 // pred_fallthru
      _
    // Predicated region
    $region46: #{tpu_custom_call.1} parent=1 // pred_check
      _
    $region47: #{tpu_custom_call.1} parent=1 // pred_check_branch
      %1232 = sbr.rel (0) target = $region49
    $region48: #{tpu_custom_call.1} parent=1 // pred_region
      %1234 = dma.done [#allocation5], 128
    $region49: #{tpu_custom_call.1} parent=1 // pred_fallthru
      _
    // Predicated region
    $region50: #{tpu_custom_call.1} parent=1 // pred_check
      _
    $region51: #{tpu_custom_call.1} parent=1 // pred_check_branch
      %1236 = sbr.rel (0) target = $region53
    $region52: #{tpu_custom_call.1} parent=1 // pred_region
      %1238 = dma.done [#allocation8], 128
    $region53: #{tpu_custom_call.1} parent=1 // pred_fallthru
      _
    %1239 = vsyncpa [#allocation4], 1
    %1240 = vsyncpa [#allocation5], 1
    %1241 = vsyncpa [#allocation8], 1

</llo_original>
